<compile_context>
chip_gen: v7x
topology: tpu7x:2x2x1
jax: 0.10.0
libtpu: 0.0.40
codegen_flags: <defaults>
</compile_context>

<pallas_src>
import functools

import jax
import jax.numpy as jnp
from jax import lax
from jax.experimental import pallas as pl
from jax.experimental.pallas import tpu as pltpu


# ---------------------------------------------------------------------------
# Kernel
# ---------------------------------------------------------------------------
def _conv3_bn_relu(h, t_col, L, w_ref, b_ref):
    """Conv1d(k=3, pad=1) + folded eval-mode BN + ReLU on (TN*L, Cin) rows.

    The three taps are fed to the MXU as a single matmul against the
    tap-stacked weight (3*Cin, Cout).  Shifted rows are built with pltpu.roll
    (XLU slot) and masked at trajectory boundaries (also kills cross-trajectory
    contamination inside the block).
    """
    R = h.shape[0]
    prev = jnp.where(t_col == 0, 0.0, pltpu.roll(h, shift=1, axis=0))
    nxt = jnp.where(t_col == L - 1, 0.0, pltpu.roll(h, shift=R - 1, axis=0))
    stacked = jnp.concatenate([prev, h, nxt], axis=-1)              # (R, 3*Cin)
    y = jnp.dot(stacked.astype(w_ref.dtype), w_ref[...],
                preferred_element_type=jnp.float32)
    y = y + b_ref[...].astype(jnp.float32)                          # BN folded in
    return jnp.maximum(y, 0.0)


def scoring_kernel(L,
                   x_ref, cond_ref,
                   w1_ref, b1_ref, w2_ref, b2_ref,
                   wc_ref, bc_ref,
                   wd0p_ref, wd0c_ref, bd0_ref,
                   wd1_ref, bd1_ref, wd2_ref, bd2_ref,
                   wf_ref, bf_ref,
                   out_ref):
    # x block: (1, TN*L, Cin) -> (TN*L, Cin); keep VPU-side math in float32.
    x = x_ref[0].astype(jnp.float32)
    R = x.shape[0]
    tn = R // L
    t_col = lax.broadcasted_iota(jnp.int32, (R, 1), 0) % L          # time index

    # ---- convolutional trunk ----
    h1 = _conv3_bn_relu(x, t_col, L, w1_ref, b1_ref)                # (R, H)
    h2 = _conv3_bn_relu(h1, t_col, L, w2_ref, b2_ref)               # (R, H)

    # AdaptiveAvgPool1d(1) + Flatten: mean over the L rows of each trajectory.
    hidden = h2.shape[-1]
    pooled = jnp.mean(h2.reshape(tn, L, hidden), axis=1)            # (TN, H)

    # ---- conditioning branch (once per block, broadcast over TN rows) ----
    c = cond_ref[0]                                                 # (1, obs)
    cf = jnp.maximum(
        jnp.dot(c.astype(wc_ref.dtype), wc_ref[...],
                preferred_element_type=jnp.float32)
        + bc_ref[...].astype(jnp.float32), 0.0)                     # (1, H)

    # ---- dense head (first layer split: no (pooled, cond) concat) ----
    h = jnp.maximum(
        jnp.dot(pooled.astype(wd0p_ref.dtype), wd0p_ref[...],
                preferred_element_type=jnp.float32)
        + jnp.dot(cf.astype(wd0c_ref.dtype), wd0c_ref[...],
                  preferred_element_type=jnp.float32)
        + bd0_ref[...].astype(jnp.float32), 0.0)                    # (TN, D)
    h = jnp.maximum(
        jnp.dot(h.astype(wd1_ref.dtype), wd1_ref[...],
                preferred_element_type=jnp.float32)
        + bd1_ref[...].astype(jnp.float32), 0.0)
    h = jnp.maximum(
        jnp.dot(h.astype(wd2_ref.dtype), wd2_ref[...],
                preferred_element_type=jnp.float32)
        + bd2_ref[...].astype(jnp.float32), 0.0)
    scores = (jnp.dot(h.astype(wf_ref.dtype), wf_ref[...],
                      preferred_element_type=jnp.float32)
              + bf_ref[...].astype(jnp.float32))                    # (TN, 1)

    out_ref[...] = scores.reshape((1,) + scores.shape)              # (1, TN, 1)


# ---------------------------------------------------------------------------
# Wrapper
# ---------------------------------------------------------------------------
def _pick_tn(N, L, max_rows=2048):
    """Trajectories per grid block: modest TN*L row count, sublane aligned."""
    tn = max(1, min(N, max(1, max_rows // max(L, 1))))
    while (tn * L) % 8 != 0:
        tn += 1
    return tn


def scoring_network_forward(x, condition, params, *, tn=None):
    """x: (B, N, 2, L)  condition: (B, obs_dim)  ->  (B, N) float32 scores."""
    B, N, Cin, L = x.shape
    obs_dim = condition.shape[-1]
    kdtype = params["w1"].dtype

    if tn is None:
        tn = _pick_tn(N, L)
    nb = -(-N // tn)                 # trajectory blocks per batch element
    Np = nb * tn
    G = B * nb                       # total grid steps

    # (B, N, 2, L) -> channel-last rows, padded to Np trajectories, split into
    # G blocks of (TN*L, Cin) rows.
    x_cl = jnp.transpose(x, (0, 1, 3, 2))                           # (B, N, L, 2)
    if Np != N:
        x_cl = jnp.pad(x_cl, ((0, 0), (0, Np - N), (0, 0), (0, 0)))
    x_r = x_cl.reshape(G, tn * L, Cin).astype(kdtype)

    # Condition: one row per trajectory BLOCK (nb per batch), not per trajectory.
    cond_g = jnp.repeat(condition.astype(kdtype), nb, axis=0).reshape(G, 1, obs_dim)

    weights = [params["w1"], params["b1"], params["w2"], params["b2"],
               params["wc"], params["bc"],
               params["wd0p"], params["wd0c"], params["bd0"],
               params["wd1"], params["bd1"], params["wd2"], params["bd2"],
               params["wf"], params["bf"]]

    def w_spec(a):
        return pl.BlockSpec(a.shape, lambda i, _nd=a.ndim: (0,) * _nd)

    out = pl.pallas_call(
        functools.partial(scoring_kernel, L),
        grid=(G,),
        out_shape=jax.ShapeDtypeStruct((G, tn, 1), jnp.float32),
        in_specs=[pl.BlockSpec((1, tn * L, Cin), lambda i: (i, 0, 0)),
                  pl.BlockSpec((1, 1, obs_dim), lambda i: (i, 0, 0))]
                 + [w_spec(a) for a in weights],
        out_specs=pl.BlockSpec((1, tn, 1), lambda i: (i, 0, 0)),
        compiler_params=pltpu.CompilerParams(
            dimension_semantics=("parallel",)),
    )(x_r, cond_g, *weights)

    return out.reshape(B, Np)[:, :N]


# ---------------------------------------------------------------------------
# Parameters (PyTorch-layout) + kernel-side preparation
# ---------------------------------------------------------------------------
def init_params(key, obs_dim, hidden_channels=32, dense_hidden_dim=64):
    """Deterministic synthetic parameters in PyTorch-like layouts."""
    H, D = hidden_channels, dense_hidden_dim
    ks = jax.random.split(key, 22)

    def n(k, shape, s=0.1):
        return s * jax.random.normal(k, shape, dtype=jnp.float32)

    return dict(
        conv1_w=n(ks[0], (H, 2, 3)), conv1_b=n(ks[1], (H,)),
        bn1_g=1.0 + n(ks[2], (H,)), bn1_b=n(ks[3], (H,)),
        bn1_rm=0.5 * n(ks[4], (H,)), bn1_rv=1.0 + jnp.abs(n(ks[5], (H,))),
        conv2_w=n(ks[6], (H, H, 3)), conv2_b=n(ks[7], (H,)),
        bn2_g=1.0 + n(ks[8], (H,)), bn2_b=n(ks[9], (H,)),
        bn2_rm=0.5 * n(ks[10], (H,)), bn2_rv=1.0 + jnp.abs(n(ks[11], (H,))),
        wc=n(ks[12], (obs_dim, H)), bc=n(ks[13], (H,)),
        wd0=n(ks[14], (2 * H, D)), bd0=n(ks[15], (D,)),
        wd1=n(ks[16], (D, D)), bd1=n(ks[17], (D,)),
        wd2=n(ks[18], (D, D)), bd2=n(ks[19], (D,)),
        wf=n(ks[20], (D, 1)), bf=n(ks[21], (1,)),
    )


def prepare_kernel_params(p, dtype=jnp.float32, eps=1e-5):
    """Fold eval-mode BN into the convs, tap-stack conv weights, split the first
    dense layer, reshape biases to (1, C), and cast to `dtype`."""
    def fold_conv(w_oik, b, gamma, beta, rmean, rvar):
        s = gamma / jnp.sqrt(rvar + eps)                            # (O,)
        # (O, I, K) -> tap-stacked (K*I, O), matching concat([prev, x, next]).
        w_st = jnp.transpose(w_oik, (2, 1, 0)).reshape(-1, w_oik.shape[0])
        w_f = w_st * s[None, :]
        b_f = b * s + (beta - rmean * s)                            # shift' = b*s + t
        return w_f.astype(dtype), b_f.reshape(1, -1).astype(dtype)

    w1, b1 = fold_conv(p["conv1_w"], p["conv1_b"], p["bn1_g"], p["bn1_b"],
                       p["bn1_rm"], p["bn1_rv"])
    w2, b2 = fold_conv(p["conv2_w"], p["conv2_b"], p["bn2_g"], p["bn2_b"],
                       p["bn2_rm"], p["bn2_rv"])
    H = p["conv1_w"].shape[0]
    return dict(
        w1=w1, b1=b1, w2=w2, b2=b2,
        wc=p["wc"].astype(dtype), bc=p["bc"].reshape(1, -1).astype(dtype),
        wd0p=p["wd0"][:H].astype(dtype), wd0c=p["wd0"][H:].astype(dtype),
        bd0=p["bd0"].reshape(1, -1).astype(dtype),
        wd1=p["wd1"].astype(dtype), bd1=p["bd1"].reshape(1, -1).astype(dtype),
        wd2=p["wd2"].astype(dtype), bd2=p["bd2"].reshape(1, -1).astype(dtype),
        wf=p["wf"].astype(dtype), bf=p["bf"].reshape(1, -1).astype(dtype),
    )


# ---------------------------------------------------------------------------
# Pure-JAX reference (unfolded BN, lax.conv — independent of the kernel tricks)
# ---------------------------------------------------------------------------
def reference_forward(x, condition, p, eps=1e-5):
    B, N, Cin, L = x.shape
    P = lax.Precision.HIGHEST
    mm = lambda a, b: jnp.dot(a, b, precision=P)
    xf = x.reshape(B * N, Cin, L)

    def conv_bn_relu(h, w, b, g, beta, rm, rv):
        y = lax.conv_general_dilated(h, w, (1,), [(1, 1)],
                                     dimension_numbers=("NCH", "OIH", "NCH"),
                                     precision=P)
        y = y + b[None, :, None]
        s = g / jnp.sqrt(rv + eps)
        y = (y - rm[None, :, None]) * s[None, :, None] + beta[None, :, None]
        return jnp.maximum(y, 0.0)

    h = conv_bn_relu(xf, p["conv1_w"], p["conv1_b"],
                     p["bn1_g"], p["bn1_b"], p["bn1_rm"], p["bn1_rv"])
    h = conv_bn_relu(h, p["conv2_w"], p["conv2_b"],
                     p["bn2_g"], p["bn2_b"], p["bn2_rm"], p["bn2_rv"])
    pooled = h.mean(axis=-1)                                        # (B*N, H)

    cf = jnp.maximum(mm(condition, p["wc"]) + p["bc"], 0.0)         # (B, H)
    cf = jnp.repeat(cf, N, axis=0)                                  # (B*N, H)

    feat = jnp.concatenate([pooled, cf], axis=-1)
    h = jnp.maximum(mm(feat, p["wd0"]) + p["bd0"], 0.0)
    h = jnp.maximum(mm(h, p["wd1"]) + p["bd1"], 0.0)
    h = jnp.maximum(mm(h, p["wd2"]) + p["bd2"], 0.0)
    out = mm(h, p["wf"]) + p["bf"]
    return out.reshape(B, N)


# ---------------------------------------------------------------------------
if __name__ == "__main__":
    B, N, L = 2, 4, 16               # batch, trajectories per batch, traj length
    obs_dim, H, D = 32, 32, 64       # obstacle_embedding_dim, hidden, dense_hidden

    key = jax.random.PRNGKey(0)
    kx, kc, kp = jax.random.split(key, 3)
    x = jax.random.normal(kx, (B, N, 2, L), dtype=jnp.float32)
    condition = jax.random.normal(kc, (B, obs_dim), dtype=jnp.float32)
    torch_params = init_params(kp, obs_dim, H, D)
    ref = reference_forward(x, condition, torch_params)

    # float32 kernel
    params_f32 = prepare_kernel_params(torch_params, dtype=jnp.float32)
    out_f32 = jax.block_until_ready(scoring_network_forward(x, condition, params_f32))
    assert out_f32.shape == (B, N), out_f32.shape
    assert jnp.allclose(out_f32, ref, atol=1e-3, rtol=1e-3), (out_f32, ref)

    # bf16-staged kernel (weights / DMA bf16, f32 accumulation & VPU math)
    params_bf16 = prepare_kernel_params(torch_params, dtype=jnp.bfloat16)
    out_bf16 = jax.block_until_ready(scoring_network_forward(x, condition, params_bf16))
    assert jnp.allclose(out_bf16, ref, atol=7.5e-2, rtol=7.5e-2), (out_bf16, ref)

    print("KERNEL_OK")
</pallas_src>

<mosaic_0001>
module attributes {stable_mosaic.version = 11 : i64} {
  func.func @scoring_kernel(%arg0: i32, %arg1: memref<1x64x2xf32, #tpu.memory_space<vmem>>, %arg2: memref<1x1x32xf32, #tpu.memory_space<vmem>>, %arg3: memref<6x32xf32, #tpu.memory_space<vmem>>, %arg4: memref<1x32xf32, #tpu.memory_space<vmem>>, %arg5: memref<96x32xf32, #tpu.memory_space<vmem>>, %arg6: memref<1x32xf32, #tpu.memory_space<vmem>>, %arg7: memref<32x32xf32, #tpu.memory_space<vmem>>, %arg8: memref<1x32xf32, #tpu.memory_space<vmem>>, %arg9: memref<32x64xf32, #tpu.memory_space<vmem>>, %arg10: memref<32x64xf32, #tpu.memory_space<vmem>>, %arg11: memref<1x64xf32, #tpu.memory_space<vmem>>, %arg12: memref<64x64xf32, #tpu.memory_space<vmem>>, %arg13: memref<1x64xf32, #tpu.memory_space<vmem>>, %arg14: memref<64x64xf32, #tpu.memory_space<vmem>>, %arg15: memref<1x64xf32, #tpu.memory_space<vmem>>, %arg16: memref<64x1xf32, #tpu.memory_space<vmem>>, %arg17: memref<1x1xf32, #tpu.memory_space<vmem>>, %arg18: memref<1x4x1xf32, #tpu.memory_space<vmem>>) attributes {dimension_semantics = [#tpu.dimension_semantics<parallel>], iteration_bounds = array<i64: 2>, scalar_prefetch = 0 : i64, scratch_operands = 0 : i64, tpu.core_type = #tpu.core_type<tc>, window_params = [{transform_indices = @transform_0, window_bounds = array<i64: 1, 64, 2>}, {transform_indices = @transform_1, window_bounds = array<i64: 1, 1, 32>}, {pipeline_mode = #tpu.pipeline_mode<synchronous>, transform_indices = @transform_2, window_bounds = array<i64: 6, 32>}, {pipeline_mode = #tpu.pipeline_mode<synchronous>, transform_indices = @transform_3, window_bounds = array<i64: 1, 32>}, {pipeline_mode = #tpu.pipeline_mode<synchronous>, transform_indices = @transform_4, window_bounds = array<i64: 96, 32>}, {pipeline_mode = #tpu.pipeline_mode<synchronous>, transform_indices = @transform_5, window_bounds = array<i64: 1, 32>}, {pipeline_mode = #tpu.pipeline_mode<synchronous>, transform_indices = @transform_6, window_bounds = array<i64: 32, 32>}, {pipeline_mode = #tpu.pipeline_mode<synchronous>, transform_indices = @transform_7, window_bounds = array<i64: 1, 32>}, {pipeline_mode = #tpu.pipeline_mode<synchronous>, transform_indices = @transform_8, window_bounds = array<i64: 32, 64>}, {pipeline_mode = #tpu.pipeline_mode<synchronous>, transform_indices = @transform_9, window_bounds = array<i64: 32, 64>}, {pipeline_mode = #tpu.pipeline_mode<synchronous>, transform_indices = @transform_10, window_bounds = array<i64: 1, 64>}, {pipeline_mode = #tpu.pipeline_mode<synchronous>, transform_indices = @transform_11, window_bounds = array<i64: 64, 64>}, {pipeline_mode = #tpu.pipeline_mode<synchronous>, transform_indices = @transform_12, window_bounds = array<i64: 1, 64>}, {pipeline_mode = #tpu.pipeline_mode<synchronous>, transform_indices = @transform_13, window_bounds = array<i64: 64, 64>}, {pipeline_mode = #tpu.pipeline_mode<synchronous>, transform_indices = @transform_14, window_bounds = array<i64: 1, 64>}, {pipeline_mode = #tpu.pipeline_mode<synchronous>, transform_indices = @transform_15, window_bounds = array<i64: 64, 1>}, {pipeline_mode = #tpu.pipeline_mode<synchronous>, transform_indices = @transform_16, window_bounds = array<i64: 1, 1>}, {transform_indices = @transform_17, window_bounds = array<i64: 1, 4, 1>}]} {
    %c0 = arith.constant 0 : index
    %c0_0 = arith.constant 0 : index
    %c0_1 = arith.constant 0 : index
    %0 = vector.load %arg1[%c0, %c0_0, %c0_1] : memref<1x64x2xf32, #tpu.memory_space<vmem>>, vector<1x64x2xf32>
    %1 = vector.shape_cast %0 : vector<1x64x2xf32> to vector<64x2xf32>
    %2 = tpu.iota {dimensions = array<i32: 0>} : vector<64x1xi32>
    %c16_i32 = arith.constant 16 : i32
    %c0_i32 = arith.constant 0 : i32
    %3 = arith.cmpi eq, %c16_i32, %c0_i32 : i32
    %c1_i32 = arith.constant 1 : i32
    %4 = arith.select %3, %c1_i32, %c16_i32 : i32
    %5 = vector.broadcast %4 : i32 to vector<64x1xi32>
    %6 = arith.remsi %2, %5 : vector<64x1xi32>
    %c0_i32_2 = arith.constant 0 : i32
    %7 = vector.broadcast %c0_i32_2 : i32 to vector<64x1xi32>
    %8 = arith.cmpi ne, %6, %7 : vector<64x1xi32>
    %c0_i32_3 = arith.constant 0 : i32
    %9 = vector.broadcast %c0_i32_3 : i32 to vector<64x1xi32>
    %10 = arith.cmpi slt, %6, %9 : vector<64x1xi32>
    %c0_i32_4 = arith.constant 0 : i32
    %11 = arith.cmpi slt, %4, %c0_i32_4 : i32
    %12 = vector.broadcast %11 : i1 to vector<64x1xi1>
    %13 = vector.broadcast %12 : vector<64x1xi1> to vector<64x1xi1>
    %14 = arith.xori %10, %13 : vector<64x1xi1>
    %15 = arith.andi %14, %8 : vector<64x1xi1>
    %16 = vector.broadcast %4 : i32 to vector<64x1xi32>
    %17 = arith.addi %6, %16 : vector<64x1xi32>
    %18 = arith.select %15, %17, %6 : vector<64x1xi1>, vector<64x1xi32>
    %c0_i32_5 = arith.constant 0 : i32
    %19 = vector.broadcast %c0_i32_5 : i32 to vector<64x1xi32>
    %20 = arith.cmpi eq, %18, %19 : vector<64x1xi32>
    %c1_i32_6 = arith.constant 1 : i32
    %21 = tpu.dynamic_rotate %1 by %c1_i32_6 dim 0 : vector<64x2xf32>, i32 -> vector<64x2xf32>
    %cst = arith.constant 0.000000e+00 : f32
    %22 = vector.shape_cast %20 : vector<64x1xi1> to vector<64x1xi1>
    %23 = vector.broadcast %22 : vector<64x1xi1> to vector<64x2xi1>
    %24 = vector.broadcast %cst : f32 to vector<64x2xf32>
    %25 = arith.select %23, %24, %21 : vector<64x2xi1>, vector<64x2xf32>
    %c15_i32 = arith.constant 15 : i32
    %26 = vector.broadcast %c15_i32 : i32 to vector<64x1xi32>
    %27 = arith.cmpi eq, %18, %26 : vector<64x1xi32>
    %c63_i32 = arith.constant 63 : i32
    %28 = tpu.dynamic_rotate %1 by %c63_i32 dim 0 : vector<64x2xf32>, i32 -> vector<64x2xf32>
    %cst_7 = arith.constant 0.000000e+00 : f32
    %29 = vector.shape_cast %27 : vector<64x1xi1> to vector<64x1xi1>
    %30 = vector.broadcast %29 : vector<64x1xi1> to vector<64x2xi1>
    %31 = vector.broadcast %cst_7 : f32 to vector<64x2xf32>
    %32 = arith.select %30, %31, %28 : vector<64x2xi1>, vector<64x2xf32>
    %33 = tpu.concatenate %25, %1, %32 in 1 : vector<64x2xf32>, vector<64x2xf32>, vector<64x2xf32> -> vector<64x6xf32>
    %c0_8 = arith.constant 0 : index
    %c0_9 = arith.constant 0 : index
    %34 = vector.load %arg3[%c0_8, %c0_9] : memref<6x32xf32, #tpu.memory_space<vmem>>, vector<6x32xf32>
    %cst_10 = arith.constant dense<0.000000e+00> : vector<64x32xf32>
    %35 = tpu.matmul %33, %34, %cst_10 {dimension_numbers = #tpu.dot_dimension_numbers<[1], [0], [0], [1], [0, 0, 1, 1], [], []>} : vector<64x6xf32>, vector<6x32xf32>, vector<64x32xf32> -> vector<64x32xf32>
    %c0_11 = arith.constant 0 : index
    %c0_12 = arith.constant 0 : index
    %36 = vector.load %arg4[%c0_11, %c0_12] : memref<1x32xf32, #tpu.memory_space<vmem>>, vector<1x32xf32>
    %37 = vector.broadcast %36 : vector<1x32xf32> to vector<64x32xf32>
    %38 = arith.addf %35, %37 : vector<64x32xf32>
    %cst_13 = arith.constant 0.000000e+00 : f32
    %39 = vector.broadcast %cst_13 : f32 to vector<64x32xf32>
    %40 = arith.maximumf %38, %39 : vector<64x32xf32>
    %c0_i32_14 = arith.constant 0 : i32
    %41 = vector.broadcast %c0_i32_14 : i32 to vector<64x1xi32>
    %42 = arith.cmpi eq, %18, %41 : vector<64x1xi32>
    %c1_i32_15 = arith.constant 1 : i32
    %43 = tpu.dynamic_rotate %40 by %c1_i32_15 dim 0 : vector<64x32xf32>, i32 -> vector<64x32xf32>
    %cst_16 = arith.constant 0.000000e+00 : f32
    %44 = vector.shape_cast %42 : vector<64x1xi1> to vector<64x1xi1>
    %45 = vector.broadcast %44 : vector<64x1xi1> to vector<64x32xi1>
    %46 = vector.broadcast %cst_16 : f32 to vector<64x32xf32>
    %47 = arith.select %45, %46, %43 : vector<64x32xi1>, vector<64x32xf32>
    %c15_i32_17 = arith.constant 15 : i32
    %48 = vector.broadcast %c15_i32_17 : i32 to vector<64x1xi32>
    %49 = arith.cmpi eq, %18, %48 : vector<64x1xi32>
    %c63_i32_18 = arith.constant 63 : i32
    %50 = tpu.dynamic_rotate %40 by %c63_i32_18 dim 0 : vector<64x32xf32>, i32 -> vector<64x32xf32>
    %cst_19 = arith.constant 0.000000e+00 : f32
    %51 = vector.shape_cast %49 : vector<64x1xi1> to vector<64x1xi1>
    %52 = vector.broadcast %51 : vector<64x1xi1> to vector<64x32xi1>
    %53 = vector.broadcast %cst_19 : f32 to vector<64x32xf32>
    %54 = arith.select %52, %53, %50 : vector<64x32xi1>, vector<64x32xf32>
    %55 = tpu.concatenate %47, %40, %54 in 1 : vector<64x32xf32>, vector<64x32xf32>, vector<64x32xf32> -> vector<64x96xf32>
    %c0_20 = arith.constant 0 : index
    %c0_21 = arith.constant 0 : index
    %56 = vector.load %arg5[%c0_20, %c0_21] : memref<96x32xf32, #tpu.memory_space<vmem>>, vector<96x32xf32>
    %cst_22 = arith.constant dense<0.000000e+00> : vector<64x32xf32>
    %57 = tpu.matmul %55, %56, %cst_22 {dimension_numbers = #tpu.dot_dimension_numbers<[1], [0], [0], [1], [0, 0, 1, 1], [], []>} : vector<64x96xf32>, vector<96x32xf32>, vector<64x32xf32> -> vector<64x32xf32>
    %c0_23 = arith.constant 0 : index
    %c0_24 = arith.constant 0 : index
    %58 = vector.load %arg6[%c0_23, %c0_24] : memref<1x32xf32, #tpu.memory_space<vmem>>, vector<1x32xf32>
    %59 = vector.broadcast %58 : vector<1x32xf32> to vector<64x32xf32>
    %60 = arith.addf %57, %59 : vector<64x32xf32>
    %cst_25 = arith.constant 0.000000e+00 : f32
    %61 = vector.broadcast %cst_25 : f32 to vector<64x32xf32>
    %62 = arith.maximumf %60, %61 : vector<64x32xf32>
    %63 = vector.shape_cast %62 : vector<64x32xf32> to vector<4x16x32xf32>
    %cst_26 = arith.constant dense<0.000000e+00> : vector<4x32xf32>
    %64 = vector.multi_reduction <add>, %63, %cst_26 [1] : vector<4x16x32xf32> to vector<4x32xf32>
    %cst_27 = arith.constant 1.600000e+01 : f32
    %65 = vector.broadcast %cst_27 : f32 to vector<4x32xf32>
    %66 = arith.divf %64, %65 : vector<4x32xf32>
    %c0_28 = arith.constant 0 : index
    %c0_29 = arith.constant 0 : index
    %c0_30 = arith.constant 0 : index
    %67 = vector.load %arg2[%c0_28, %c0_29, %c0_30] : memref<1x1x32xf32, #tpu.memory_space<vmem>>, vector<1x1x32xf32>
    %68 = vector.shape_cast %67 : vector<1x1x32xf32> to vector<1x32xf32>
    %c0_31 = arith.constant 0 : index
    %c0_32 = arith.constant 0 : index
    %69 = vector.load %arg7[%c0_31, %c0_32] : memref<32x32xf32, #tpu.memory_space<vmem>>, vector<32x32xf32>
    %cst_33 = arith.constant dense<0.000000e+00> : vector<1x32xf32>
    %70 = tpu.matmul %68, %69, %cst_33 {dimension_numbers = #tpu.dot_dimension_numbers<[1], [0], [0], [1], [0, 0, 1, 1], [], []>} : vector<1x32xf32>, vector<32x32xf32>, vector<1x32xf32> -> vector<1x32xf32>
    %c0_34 = arith.constant 0 : index
    %c0_35 = arith.constant 0 : index
    %71 = vector.load %arg8[%c0_34, %c0_35] : memref<1x32xf32, #tpu.memory_space<vmem>>, vector<1x32xf32>
    %72 = arith.addf %70, %71 : vector<1x32xf32>
    %cst_36 = arith.constant 0.000000e+00 : f32
    %73 = vector.broadcast %cst_36 : f32 to vector<1x32xf32>
    %74 = arith.maximumf %72, %73 : vector<1x32xf32>
    %c0_37 = arith.constant 0 : index
    %c0_38 = arith.constant 0 : index
    %75 = vector.load %arg9[%c0_37, %c0_38] : memref<32x64xf32, #tpu.memory_space<vmem>>, vector<32x64xf32>
    %cst_39 = arith.constant dense<0.000000e+00> : vector<4x64xf32>
    %76 = tpu.matmul %66, %75, %cst_39 {dimension_numbers = #tpu.dot_dimension_numbers<[1], [0], [0], [1], [0, 0, 1, 1], [], []>} : vector<4x32xf32>, vector<32x64xf32>, vector<4x64xf32> -> vector<4x64xf32>
    %c0_40 = arith.constant 0 : index
    %c0_41 = arith.constant 0 : index
    %77 = vector.load %arg10[%c0_40, %c0_41] : memref<32x64xf32, #tpu.memory_space<vmem>>, vector<32x64xf32>
    %cst_42 = arith.constant dense<0.000000e+00> : vector<1x64xf32>
    %78 = tpu.matmul %74, %77, %cst_42 {dimension_numbers = #tpu.dot_dimension_numbers<[1], [0], [0], [1], [0, 0, 1, 1], [], []>} : vector<1x32xf32>, vector<32x64xf32>, vector<1x64xf32> -> vector<1x64xf32>
    %79 = vector.broadcast %78 : vector<1x64xf32> to vector<4x64xf32>
    %80 = arith.addf %76, %79 : vector<4x64xf32>
    %c0_43 = arith.constant 0 : index
    %c0_44 = arith.constant 0 : index
    %81 = vector.load %arg11[%c0_43, %c0_44] : memref<1x64xf32, #tpu.memory_space<vmem>>, vector<1x64xf32>
    %82 = vector.broadcast %81 : vector<1x64xf32> to vector<4x64xf32>
    %83 = arith.addf %80, %82 : vector<4x64xf32>
    %cst_45 = arith.constant 0.000000e+00 : f32
    %84 = vector.broadcast %cst_45 : f32 to vector<4x64xf32>
    %85 = arith.maximumf %83, %84 : vector<4x64xf32>
    %c0_46 = arith.constant 0 : index
    %c0_47 = arith.constant 0 : index
    %86 = vector.load %arg12[%c0_46, %c0_47] : memref<64x64xf32, #tpu.memory_space<vmem>>, vector<64x64xf32>
    %cst_48 = arith.constant dense<0.000000e+00> : vector<4x64xf32>
    %87 = tpu.matmul %85, %86, %cst_48 {dimension_numbers = #tpu.dot_dimension_numbers<[1], [0], [0], [1], [0, 0, 1, 1], [], []>} : vector<4x64xf32>, vector<64x64xf32>, vector<4x64xf32> -> vector<4x64xf32>
    %c0_49 = arith.constant 0 : index
    %c0_50 = arith.constant 0 : index
    %88 = vector.load %arg13[%c0_49, %c0_50] : memref<1x64xf32, #tpu.memory_space<vmem>>, vector<1x64xf32>
    %89 = vector.broadcast %88 : vector<1x64xf32> to vector<4x64xf32>
    %90 = arith.addf %87, %89 : vector<4x64xf32>
    %cst_51 = arith.constant 0.000000e+00 : f32
    %91 = vector.broadcast %cst_51 : f32 to vector<4x64xf32>
    %92 = arith.maximumf %90, %91 : vector<4x64xf32>
    %c0_52 = arith.constant 0 : index
    %c0_53 = arith.constant 0 : index
    %93 = vector.load %arg14[%c0_52, %c0_53] : memref<64x64xf32, #tpu.memory_space<vmem>>, vector<64x64xf32>
    %cst_54 = arith.constant dense<0.000000e+00> : vector<4x64xf32>
    %94 = tpu.matmul %92, %93, %cst_54 {dimension_numbers = #tpu.dot_dimension_numbers<[1], [0], [0], [1], [0, 0, 1, 1], [], []>} : vector<4x64xf32>, vector<64x64xf32>, vector<4x64xf32> -> vector<4x64xf32>
    %c0_55 = arith.constant 0 : index
    %c0_56 = arith.constant 0 : index
    %95 = vector.load %arg15[%c0_55, %c0_56] : memref<1x64xf32, #tpu.memory_space<vmem>>, vector<1x64xf32>
    %96 = vector.broadcast %95 : vector<1x64xf32> to vector<4x64xf32>
    %97 = arith.addf %94, %96 : vector<4x64xf32>
    %cst_57 = arith.constant 0.000000e+00 : f32
    %98 = vector.broadcast %cst_57 : f32 to vector<4x64xf32>
    %99 = arith.maximumf %97, %98 : vector<4x64xf32>
    %c0_58 = arith.constant 0 : index
    %c0_59 = arith.constant 0 : index
    %100 = vector.load %arg16[%c0_58, %c0_59] : memref<64x1xf32, #tpu.memory_space<vmem>>, vector<64x1xf32>
    %cst_60 = arith.constant dense<0.000000e+00> : vector<4x1xf32>
    %101 = tpu.matmul %99, %100, %cst_60 {dimension_numbers = #tpu.dot_dimension_numbers<[1], [0], [0], [1], [0, 0, 1, 1], [], []>} : vector<4x64xf32>, vector<64x1xf32>, vector<4x1xf32> -> vector<4x1xf32>
    %c0_61 = arith.constant 0 : index
    %c0_62 = arith.constant 0 : index
    %102 = vector.load %arg17[%c0_61, %c0_62] : memref<1x1xf32, #tpu.memory_space<vmem>>, vector<1x1xf32>
    %103 = vector.broadcast %102 : vector<1x1xf32> to vector<4x1xf32>
    %104 = arith.addf %101, %103 : vector<4x1xf32>
    %105 = vector.shape_cast %104 : vector<4x1xf32> to vector<1x4x1xf32>
    %c0_63 = arith.constant 0 : index
    %c0_64 = arith.constant 0 : index
    %c0_65 = arith.constant 0 : index
    %106 = vector.load %arg18[%c0_63, %c0_64, %c0_65] : memref<1x4x1xf32, #tpu.memory_space<vmem>>, vector<1x4x1xf32>
    tpu.vector_store %arg18[%c0_63, %c0_64, %c0_65], %105 {strides = array<i32>} : memref<1x4x1xf32, #tpu.memory_space<vmem>>, vector<1x4x1xf32>,
    return
  }
  func.func @transform_0(%arg0: i32) -> (i32, i32, i32) {
    %c0_i32 = arith.constant 0 : i32
    %c0_i32_0 = arith.constant 0 : i32
    %c0_i32_1 = arith.constant 0 : i32
    return %arg0, %c0_i32, %c0_i32_0 : i32, i32, i32
  }
  func.func @transform_1(%arg0: i32) -> (i32, i32, i32) {
    %c0_i32 = arith.constant 0 : i32
    %c0_i32_0 = arith.constant 0 : i32
    %c0_i32_1 = arith.constant 0 : i32
    return %arg0, %c0_i32, %c0_i32_0 : i32, i32, i32
  }
  func.func @transform_2(%arg0: i32) -> (i32, i32) {
    %c0_i32 = arith.constant 0 : i32
    %c0_i32_0 = arith.constant 0 : i32
    %c0_i32_1 = arith.constant 0 : i32
    return %c0_i32, %c0_i32_0 : i32, i32
  }
  func.func @transform_3(%arg0: i32) -> (i32, i32) {
    %c0_i32 = arith.constant 0 : i32
    %c0_i32_0 = arith.constant 0 : i32
    %c0_i32_1 = arith.constant 0 : i32
    return %c0_i32, %c0_i32_0 : i32, i32
  }
  func.func @transform_4(%arg0: i32) -> (i32, i32) {
    %c0_i32 = arith.constant 0 : i32
    %c0_i32_0 = arith.constant 0 : i32
    %c0_i32_1 = arith.constant 0 : i32
    return %c0_i32, %c0_i32_0 : i32, i32
  }
  func.func @transform_5(%arg0: i32) -> (i32, i32) {
    %c0_i32 = arith.constant 0 : i32
    %c0_i32_0 = arith.constant 0 : i32
    %c0_i32_1 = arith.constant 0 : i32
    return %c0_i32, %c0_i32_0 : i32, i32
  }
  func.func @transform_6(%arg0: i32) -> (i32, i32) {
    %c0_i32 = arith.constant 0 : i32
    %c0_i32_0 = arith.constant 0 : i32
    %c0_i32_1 = arith.constant 0 : i32
    return %c0_i32, %c0_i32_0 : i32, i32
  }
  func.func @transform_7(%arg0: i32) -> (i32, i32) {
    %c0_i32 = arith.constant 0 : i32
    %c0_i32_0 = arith.constant 0 : i32
    %c0_i32_1 = arith.constant 0 : i32
    return %c0_i32, %c0_i32_0 : i32, i32
  }
  func.func @transform_8(%arg0: i32) -> (i32, i32) {
    %c0_i32 = arith.constant 0 : i32
    %c0_i32_0 = arith.constant 0 : i32
    %c0_i32_1 = arith.constant 0 : i32
    return %c0_i32, %c0_i32_0 : i32, i32
  }
  func.func @transform_9(%arg0: i32) -> (i32, i32) {
    %c0_i32 = arith.constant 0 : i32
    %c0_i32_0 = arith.constant 0 : i32
    %c0_i32_1 = arith.constant 0 : i32
    return %c0_i32, %c0_i32_0 : i32, i32
  }
  func.func @transform_10(%arg0: i32) -> (i32, i32) {
    %c0_i32 = arith.constant 0 : i32
    %c0_i32_0 = arith.constant 0 : i32
    %c0_i32_1 = arith.constant 0 : i32
    return %c0_i32, %c0_i32_0 : i32, i32
  }
  func.func @transform_11(%arg0: i32) -> (i32, i32) {
    %c0_i32 = arith.constant 0 : i32
    %c0_i32_0 = arith.constant 0 : i32
    %c0_i32_1 = arith.constant 0 : i32
    return %c0_i32, %c0_i32_0 : i32, i32
  }
  func.func @transform_12(%arg0: i32) -> (i32, i32) {
    %c0_i32 = arith.constant 0 : i32
    %c0_i32_0 = arith.constant 0 : i32
    %c0_i32_1 = arith.constant 0 : i32
    return %c0_i32, %c0_i32_0 : i32, i32
  }
  func.func @transform_13(%arg0: i32) -> (i32, i32) {
    %c0_i32 = arith.constant 0 : i32
    %c0_i32_0 = arith.constant 0 : i32
    %c0_i32_1 = arith.constant 0 : i32
    return %c0_i32, %c0_i32_0 : i32, i32
  }
  func.func @transform_14(%arg0: i32) -> (i32, i32) {
    %c0_i32 = arith.constant 0 : i32
    %c0_i32_0 = arith.constant 0 : i32
    %c0_i32_1 = arith.constant 0 : i32
    return %c0_i32, %c0_i32_0 : i32, i32
  }
  func.func @transform_15(%arg0: i32) -> (i32, i32) {
    %c0_i32 = arith.constant 0 : i32
    %c0_i32_0 = arith.constant 0 : i32
    %c0_i32_1 = arith.constant 0 : i32
    return %c0_i32, %c0_i32_0 : i32, i32
  }
  func.func @transform_16(%arg0: i32) -> (i32, i32) {
    %c0_i32 = arith.constant 0 : i32
    %c0_i32_0 = arith.constant 0 : i32
    %c0_i32_1 = arith.constant 0 : i32
    return %c0_i32, %c0_i32_0 : i32, i32
  }
  func.func @transform_17(%arg0: i32) -> (i32, i32, i32) {
    %c0_i32 = arith.constant 0 : i32
    %c0_i32_0 = arith.constant 0 : i32
    %c0_i32_1 = arith.constant 0 : i32
    return %arg0, %c0_i32, %c0_i32_0 : i32, i32, i32
  }
}

</mosaic_0001>

<llo_original>
// kernel: tpu_custom_call.1
$region0: #{tpu_custom_call.1}
  #allocation0 [shape = 'u32[]', space=smem, size = 0x4, offset = 0x4, fixed_abs, tag = 'smem constant byte address 0x4 - core index']
  #allocation1 [shape = 'u32[144,128]{1,0:T(1,128)}', space=vmem, size = 0x12000, scoped, tag = 'internal scratch']
  #allocation2 [shape = 'f32[1,1]{1,0:T(1,128)S(1)}', space=vmem, size = 0x200, scoped, tag = 'scoped memory for tpu_custom_call.1']
  %s0 = inlined_call_operand.vmem [shape: f32[2,64,2], index: 0, kind: input, shape index: {}]
  %s1 = inlined_call_operand.vmem [shape: f32[2,1,32], index: 1, kind: input, shape index: {}]
  %s2 = inlined_call_operand.vmem [shape: f32[6,32], index: 2, kind: input, shape index: {}]
  %s3 = inlined_call_operand.vmem [shape: f32[1,32], index: 3, kind: input, shape index: {}]
  %s4 = inlined_call_operand.vmem [shape: f32[96,32], index: 4, kind: input, shape index: {}]
  %s5 = inlined_call_operand.vmem [shape: f32[1,32], index: 5, kind: input, shape index: {}]
  %s6 = inlined_call_operand.vmem [shape: f32[32,32], index: 6, kind: input, shape index: {}]
  %s7 = inlined_call_operand.vmem [shape: f32[1,32], index: 7, kind: input, shape index: {}]
  %s8 = inlined_call_operand.vmem [shape: f32[32,64], index: 8, kind: input, shape index: {}]
  %s9 = inlined_call_operand.vmem [shape: f32[32,64], index: 9, kind: input, shape index: {}]
  %s10 = inlined_call_operand.vmem [shape: f32[1,64], index: 10, kind: input, shape index: {}]
  %s11 = inlined_call_operand.vmem [shape: f32[64,64], index: 11, kind: input, shape index: {}]
  %s12 = inlined_call_operand.vmem [shape: f32[1,64], index: 12, kind: input, shape index: {}]
  %s13 = inlined_call_operand.vmem [shape: f32[64,64], index: 13, kind: input, shape index: {}]
  %s14 = inlined_call_operand.vmem [shape: f32[1,64], index: 14, kind: input, shape index: {}]
  %s15 = inlined_call_operand.vmem [shape: f32[64,1], index: 15, kind: input, shape index: {}]
  %s16 = inlined_call_operand.<no memory space> [shape: f32[1,1], index: 16, kind: input, shape index: {}]
  %s17 = inlined_call_operand.vmem [shape: f32[2,4,1], index: 17, kind: output, shape index: {}]
  %s18 = sld [smem:[#allocation0]]
  $region101: #{tpu_custom_call.1} parent=0
    _
  %s20 = ssub.s32 1, %s18
  %s21 = scalar_select 0, %s20, %s18
  %v22 = vstv %s16
  %23 = vst [vmem:[#allocation2] sm:$0x1] %v22
  loop: start=0, step=1, limit=4
  $region2: #{tpu_custom_call.1} parent=0 // loop_pre_header
    _
  $region3: #{tpu_custom_call.1} parent=0 // loop_header
    %s25 = sphi 0, %s29
    %p26 = scmp.ge.s32.totalorder %s25, 4
    %s35 = sphi 0, %s37
    %s38 = sphi 0, %s35
    %s39 = sphi 0, %s38
    %s55 = sphi 0, %s39
    %s61 = sphi 0, %s63
    %s64 = sphi 0, %s61
    %s65 = sphi 0, %s64
    %s81 = sphi 0, %s65
    %s85 = sphi 0, %s85
    %s87 = sphi 0, %s85
    %s88 = sphi 0, %s87
    %s102 = sphi 0, %s88
    %s106 = sphi 0, %s106
    %s108 = sphi 0, %s106
    %s109 = sphi 0, %s108
    %s123 = sphi 0, %s109
    %s127 = sphi 0, %s127
    %s129 = sphi 0, %s127
    %s130 = sphi 0, %s129
    %s144 = sphi 0, %s130
    %s148 = sphi 0, %s148
    %s150 = sphi 0, %s148
    %s151 = sphi 0, %s150
    %s165 = sphi 0, %s151
    %s169 = sphi 0, %s169
    %s171 = sphi 0, %s169
    %s172 = sphi 0, %s171
    %s186 = sphi 0, %s172
    %s190 = sphi 0, %s190
    %s192 = sphi 0, %s190
    %s193 = sphi 0, %s192
    %s207 = sphi 0, %s193
    %s211 = sphi 0, %s211
    %s213 = sphi 0, %s211
    %s214 = sphi 0, %s213
    %s228 = sphi 0, %s214
    %s232 = sphi 0, %s232
    %s234 = sphi 0, %s232
    %s235 = sphi 0, %s234
    %s249 = sphi 0, %s235
    %s253 = sphi 0, %s253
    %s255 = sphi 0, %s253
    %s256 = sphi 0, %s255
    %s270 = sphi 0, %s256
    %s274 = sphi 0, %s274
    %s276 = sphi 0, %s274
    %s277 = sphi 0, %s276
    %s291 = sphi 0, %s277
    %s295 = sphi 0, %s295
    %s297 = sphi 0, %s295
    %s298 = sphi 0, %s297
    %s312 = sphi 0, %s298
    %s316 = sphi 0, %s316
    %s318 = sphi 0, %s316
    %s319 = sphi 0, %s318
    %s333 = sphi 0, %s319
    %s337 = sphi 0, %s337
    %s339 = sphi 0, %s337
    %s340 = sphi 0, %s339
    %s354 = sphi 0, %s340
    %s358 = sphi 0, %s358
    %s360 = sphi 0, %s358
    %s361 = sphi 0, %s360
    %s375 = sphi 0, %s361
    %s379 = sphi 0, %s379
    %s381 = sphi 0, %s379
    %s382 = sphi 0, %s381
    %s396 = sphi 0, %s382
    %s402 = sphi 0, %s404
    %s405 = sphi 0, %s402
    %s406 = sphi 0, %s405
    %s422 = sphi 0, %s406
  $region4: #{tpu_custom_call.1} parent=0 // loop_header_branch
    %28 = sbr.rel (%p26) target = $region8
  $region5: #{tpu_custom_call.1} parent=0 // loop_body
    %s30 = ssub.s32 %s25, 1
    %s31 = ssub.s32 %s25, 2
    %s32 = sadd.s32 %s25, 1
    %s33 = ssub.s32 %s25, %s32
    %p34 = scmp.eq.s32.totalorder %s33, 0
    %s36 = sadd.s32 %s35, 1
    %s37 = scalar_select %p34, %s35, %s36
    %p40 = pneg %p34
    %p41 = scmp.eq.s32.totalorder %s25, 1
    %p42 = por %p40, %p41
    %p43 = scmp.ne.s32.totalorder %s35, %s38
    %p44 = scmp.eq.s32.totalorder %s25, 0
    %p45 = por %p43, %p44
    %p46 = scmp.ne.s32.totalorder %s35, %s38
    %p47 = scmp.eq.s32.totalorder %s30, 1
    %p48 = por %p46, %p47
    %p49 = scmp.ne.s32.totalorder %s38, %s39
    %p50 = scmp.eq.s32.totalorder %s30, 0
    %p51 = por %p49, %p50
    %p52 = scmp.ne.s32.totalorder %s38, %s39
    %p53 = scmp.eq.s32.totalorder %s31, 1
    %p54 = por %p52, %p53
    %p56 = scmp.ne.s32.totalorder %s39, %s55
    %p57 = scmp.eq.s32.totalorder %s31, 0
    %p58 = por %p56, %p57
    %s59 = ssub.s32 %s25, %s32
    %p60 = scmp.eq.s32.totalorder %s59, 0
    %s62 = sadd.s32 %s61, 1
    %s63 = scalar_select %p60, %s61, %s62
    %p66 = pneg %p60
    %p67 = scmp.eq.s32.totalorder %s25, 1
    %p68 = por %p66, %p67
    %p69 = scmp.ne.s32.totalorder %s61, %s64
    %p70 = scmp.eq.s32.totalorder %s25, 0
    %p71 = por %p69, %p70
    %p72 = scmp.ne.s32.totalorder %s61, %s64
    %p73 = scmp.eq.s32.totalorder %s30, 1
    %p74 = por %p72, %p73
    %p75 = scmp.ne.s32.totalorder %s64, %s65
    %p76 = scmp.eq.s32.totalorder %s30, 0
    %p77 = por %p75, %p76
    %p78 = scmp.ne.s32.totalorder %s64, %s65
    %p79 = scmp.eq.s32.totalorder %s31, 1
    %p80 = por %p78, %p79
    %p82 = scmp.ne.s32.totalorder %s65, %s81
    %p83 = scmp.eq.s32.totalorder %s31, 0
    %p84 = por %p82, %p83
    %s86 = sadd.s32 %s85, 1
    %p89 = scmp.eq.s32.totalorder %s25, 1
    %p90 = scmp.ne.s32.totalorder %s85, %s87
    %p91 = scmp.eq.s32.totalorder %s25, 0
    %p92 = por %p90, %p91
    %p93 = scmp.ne.s32.totalorder %s85, %s87
    %p94 = scmp.eq.s32.totalorder %s30, 1
    %p95 = por %p93, %p94
    %p96 = scmp.ne.s32.totalorder %s87, %s88
    %p97 = scmp.eq.s32.totalorder %s30, 0
    %p98 = por %p96, %p97
    %p99 = scmp.ne.s32.totalorder %s87, %s88
    %p100 = scmp.eq.s32.totalorder %s31, 1
    %p101 = por %p99, %p100
    %p103 = scmp.ne.s32.totalorder %s88, %s102
    %p104 = scmp.eq.s32.totalorder %s31, 0
    %p105 = por %p103, %p104
    %s107 = sadd.s32 %s106, 1
    %p110 = scmp.eq.s32.totalorder %s25, 1
    %p111 = scmp.ne.s32.totalorder %s106, %s108
    %p112 = scmp.eq.s32.totalorder %s25, 0
    %p113 = por %p111, %p112
    %p114 = scmp.ne.s32.totalorder %s106, %s108
    %p115 = scmp.eq.s32.totalorder %s30, 1
    %p116 = por %p114, %p115
    %p117 = scmp.ne.s32.totalorder %s108, %s109
    %p118 = scmp.eq.s32.totalorder %s30, 0
    %p119 = por %p117, %p118
    %p120 = scmp.ne.s32.totalorder %s108, %s109
    %p121 = scmp.eq.s32.totalorder %s31, 1
    %p122 = por %p120, %p121
    %p124 = scmp.ne.s32.totalorder %s109, %s123
    %p125 = scmp.eq.s32.totalorder %s31, 0
    %p126 = por %p124, %p125
    %s128 = sadd.s32 %s127, 1
    %p131 = scmp.eq.s32.totalorder %s25, 1
    %p132 = scmp.ne.s32.totalorder %s127, %s129
    %p133 = scmp.eq.s32.totalorder %s25, 0
    %p134 = por %p132, %p133
    %p135 = scmp.ne.s32.totalorder %s127, %s129
    %p136 = scmp.eq.s32.totalorder %s30, 1
    %p137 = por %p135, %p136
    %p138 = scmp.ne.s32.totalorder %s129, %s130
    %p139 = scmp.eq.s32.totalorder %s30, 0
    %p140 = por %p138, %p139
    %p141 = scmp.ne.s32.totalorder %s129, %s130
    %p142 = scmp.eq.s32.totalorder %s31, 1
    %p143 = por %p141, %p142
    %p145 = scmp.ne.s32.totalorder %s130, %s144
    %p146 = scmp.eq.s32.totalorder %s31, 0
    %p147 = por %p145, %p146
    %s149 = sadd.s32 %s148, 1
    %p152 = scmp.eq.s32.totalorder %s25, 1
    %p153 = scmp.ne.s32.totalorder %s148, %s150
    %p154 = scmp.eq.s32.totalorder %s25, 0
    %p155 = por %p153, %p154
    %p156 = scmp.ne.s32.totalorder %s148, %s150
    %p157 = scmp.eq.s32.totalorder %s30, 1
    %p158 = por %p156, %p157
    %p159 = scmp.ne.s32.totalorder %s150, %s151
    %p160 = scmp.eq.s32.totalorder %s30, 0
    %p161 = por %p159, %p160
    %p162 = scmp.ne.s32.totalorder %s150, %s151
    %p163 = scmp.eq.s32.totalorder %s31, 1
    %p164 = por %p162, %p163
    %p166 = scmp.ne.s32.totalorder %s151, %s165
    %p167 = scmp.eq.s32.totalorder %s31, 0
    %p168 = por %p166, %p167
    %s170 = sadd.s32 %s169, 1
    %p173 = scmp.eq.s32.totalorder %s25, 1
    %p174 = scmp.ne.s32.totalorder %s169, %s171
    %p175 = scmp.eq.s32.totalorder %s25, 0
    %p176 = por %p174, %p175
    %p177 = scmp.ne.s32.totalorder %s169, %s171
    %p178 = scmp.eq.s32.totalorder %s30, 1
    %p179 = por %p177, %p178
    %p180 = scmp.ne.s32.totalorder %s171, %s172
    %p181 = scmp.eq.s32.totalorder %s30, 0
    %p182 = por %p180, %p181
    %p183 = scmp.ne.s32.totalorder %s171, %s172
    %p184 = scmp.eq.s32.totalorder %s31, 1
    %p185 = por %p183, %p184
    %p187 = scmp.ne.s32.totalorder %s172, %s186
    %p188 = scmp.eq.s32.totalorder %s31, 0
    %p189 = por %p187, %p188
    %s191 = sadd.s32 %s190, 1
    %p194 = scmp.eq.s32.totalorder %s25, 1
    %p195 = scmp.ne.s32.totalorder %s190, %s192
    %p196 = scmp.eq.s32.totalorder %s25, 0
    %p197 = por %p195, %p196
    %p198 = scmp.ne.s32.totalorder %s190, %s192
    %p199 = scmp.eq.s32.totalorder %s30, 1
    %p200 = por %p198, %p199
    %p201 = scmp.ne.s32.totalorder %s192, %s193
    %p202 = scmp.eq.s32.totalorder %s30, 0
    %p203 = por %p201, %p202
    %p204 = scmp.ne.s32.totalorder %s192, %s193
    %p205 = scmp.eq.s32.totalorder %s31, 1
    %p206 = por %p204, %p205
    %p208 = scmp.ne.s32.totalorder %s193, %s207
    %p209 = scmp.eq.s32.totalorder %s31, 0
    %p210 = por %p208, %p209
    %s212 = sadd.s32 %s211, 1
    %p215 = scmp.eq.s32.totalorder %s25, 1
    %p216 = scmp.ne.s32.totalorder %s211, %s213
    %p217 = scmp.eq.s32.totalorder %s25, 0
    %p218 = por %p216, %p217
    %p219 = scmp.ne.s32.totalorder %s211, %s213
    %p220 = scmp.eq.s32.totalorder %s30, 1
    %p221 = por %p219, %p220
    %p222 = scmp.ne.s32.totalorder %s213, %s214
    %p223 = scmp.eq.s32.totalorder %s30, 0
    %p224 = por %p222, %p223
    %p225 = scmp.ne.s32.totalorder %s213, %s214
    %p226 = scmp.eq.s32.totalorder %s31, 1
    %p227 = por %p225, %p226
    %p229 = scmp.ne.s32.totalorder %s214, %s228
    %p230 = scmp.eq.s32.totalorder %s31, 0
    %p231 = por %p229, %p230
    %s233 = sadd.s32 %s232, 1
    %p236 = scmp.eq.s32.totalorder %s25, 1
    %p237 = scmp.ne.s32.totalorder %s232, %s234
    %p238 = scmp.eq.s32.totalorder %s25, 0
    %p239 = por %p237, %p238
    %p240 = scmp.ne.s32.totalorder %s232, %s234
    %p241 = scmp.eq.s32.totalorder %s30, 1
    %p242 = por %p240, %p241
    %p243 = scmp.ne.s32.totalorder %s234, %s235
    %p244 = scmp.eq.s32.totalorder %s30, 0
    %p245 = por %p243, %p244
    %p246 = scmp.ne.s32.totalorder %s234, %s235
    %p247 = scmp.eq.s32.totalorder %s31, 1
    %p248 = por %p246, %p247
    %p250 = scmp.ne.s32.totalorder %s235, %s249
    %p251 = scmp.eq.s32.totalorder %s31, 0
    %p252 = por %p250, %p251
    %s254 = sadd.s32 %s253, 1
    %p257 = scmp.eq.s32.totalorder %s25, 1
    %p258 = scmp.ne.s32.totalorder %s253, %s255
    %p259 = scmp.eq.s32.totalorder %s25, 0
    %p260 = por %p258, %p259
    %p261 = scmp.ne.s32.totalorder %s253, %s255
    %p262 = scmp.eq.s32.totalorder %s30, 1
    %p263 = por %p261, %p262
    %p264 = scmp.ne.s32.totalorder %s255, %s256
    %p265 = scmp.eq.s32.totalorder %s30, 0
    %p266 = por %p264, %p265
    %p267 = scmp.ne.s32.totalorder %s255, %s256
    %p268 = scmp.eq.s32.totalorder %s31, 1
    %p269 = por %p267, %p268
    %p271 = scmp.ne.s32.totalorder %s256, %s270
    %p272 = scmp.eq.s32.totalorder %s31, 0
    %p273 = por %p271, %p272
    %s275 = sadd.s32 %s274, 1
    %p278 = scmp.eq.s32.totalorder %s25, 1
    %p279 = scmp.ne.s32.totalorder %s274, %s276
    %p280 = scmp.eq.s32.totalorder %s25, 0
    %p281 = por %p279, %p280
    %p282 = scmp.ne.s32.totalorder %s274, %s276
    %p283 = scmp.eq.s32.totalorder %s30, 1
    %p284 = por %p282, %p283
    %p285 = scmp.ne.s32.totalorder %s276, %s277
    %p286 = scmp.eq.s32.totalorder %s30, 0
    %p287 = por %p285, %p286
    %p288 = scmp.ne.s32.totalorder %s276, %s277
    %p289 = scmp.eq.s32.totalorder %s31, 1
    %p290 = por %p288, %p289
    %p292 = scmp.ne.s32.totalorder %s277, %s291
    %p293 = scmp.eq.s32.totalorder %s31, 0
    %p294 = por %p292, %p293
    %s296 = sadd.s32 %s295, 1
    %p299 = scmp.eq.s32.totalorder %s25, 1
    %p300 = scmp.ne.s32.totalorder %s295, %s297
    %p301 = scmp.eq.s32.totalorder %s25, 0
    %p302 = por %p300, %p301
    %p303 = scmp.ne.s32.totalorder %s295, %s297
    %p304 = scmp.eq.s32.totalorder %s30, 1
    %p305 = por %p303, %p304
    %p306 = scmp.ne.s32.totalorder %s297, %s298
    %p307 = scmp.eq.s32.totalorder %s30, 0
    %p308 = por %p306, %p307
    %p309 = scmp.ne.s32.totalorder %s297, %s298
    %p310 = scmp.eq.s32.totalorder %s31, 1
    %p311 = por %p309, %p310
    %p313 = scmp.ne.s32.totalorder %s298, %s312
    %p314 = scmp.eq.s32.totalorder %s31, 0
    %p315 = por %p313, %p314
    %s317 = sadd.s32 %s316, 1
    %p320 = scmp.eq.s32.totalorder %s25, 1
    %p321 = scmp.ne.s32.totalorder %s316, %s318
    %p322 = scmp.eq.s32.totalorder %s25, 0
    %p323 = por %p321, %p322
    %p324 = scmp.ne.s32.totalorder %s316, %s318
    %p325 = scmp.eq.s32.totalorder %s30, 1
    %p326 = por %p324, %p325
    %p327 = scmp.ne.s32.totalorder %s318, %s319
    %p328 = scmp.eq.s32.totalorder %s30, 0
    %p329 = por %p327, %p328
    %p330 = scmp.ne.s32.totalorder %s318, %s319
    %p331 = scmp.eq.s32.totalorder %s31, 1
    %p332 = por %p330, %p331
    %p334 = scmp.ne.s32.totalorder %s319, %s333
    %p335 = scmp.eq.s32.totalorder %s31, 0
    %p336 = por %p334, %p335
    %s338 = sadd.s32 %s337, 1
    %p341 = scmp.eq.s32.totalorder %s25, 1
    %p342 = scmp.ne.s32.totalorder %s337, %s339
    %p343 = scmp.eq.s32.totalorder %s25, 0
    %p344 = por %p342, %p343
    %p345 = scmp.ne.s32.totalorder %s337, %s339
    %p346 = scmp.eq.s32.totalorder %s30, 1
    %p347 = por %p345, %p346
    %p348 = scmp.ne.s32.totalorder %s339, %s340
    %p349 = scmp.eq.s32.totalorder %s30, 0
    %p350 = por %p348, %p349
    %p351 = scmp.ne.s32.totalorder %s339, %s340
    %p352 = scmp.eq.s32.totalorder %s31, 1
    %p353 = por %p351, %p352
    %p355 = scmp.ne.s32.totalorder %s340, %s354
    %p356 = scmp.eq.s32.totalorder %s31, 0
    %p357 = por %p355, %p356
    %s359 = sadd.s32 %s358, 1
    %p362 = scmp.eq.s32.totalorder %s25, 1
    %p363 = scmp.ne.s32.totalorder %s358, %s360
    %p364 = scmp.eq.s32.totalorder %s25, 0
    %p365 = por %p363, %p364
    %p366 = scmp.ne.s32.totalorder %s358, %s360
    %p367 = scmp.eq.s32.totalorder %s30, 1
    %p368 = por %p366, %p367
    %p369 = scmp.ne.s32.totalorder %s360, %s361
    %p370 = scmp.eq.s32.totalorder %s30, 0
    %p371 = por %p369, %p370
    %p372 = scmp.ne.s32.totalorder %s360, %s361
    %p373 = scmp.eq.s32.totalorder %s31, 1
    %p374 = por %p372, %p373
    %p376 = scmp.ne.s32.totalorder %s361, %s375
    %p377 = scmp.eq.s32.totalorder %s31, 0
    %p378 = por %p376, %p377
    %s380 = sadd.s32 %s379, 1
    %p383 = scmp.eq.s32.totalorder %s25, 1
    %p384 = scmp.ne.s32.totalorder %s379, %s381
    %p385 = scmp.eq.s32.totalorder %s25, 0
    %p386 = por %p384, %p385
    %p387 = scmp.ne.s32.totalorder %s379, %s381
    %p388 = scmp.eq.s32.totalorder %s30, 1
    %p389 = por %p387, %p388
    %p390 = scmp.ne.s32.totalorder %s381, %s382
    %p391 = scmp.eq.s32.totalorder %s30, 0
    %p392 = por %p390, %p391
    %p393 = scmp.ne.s32.totalorder %s381, %s382
    %p394 = scmp.eq.s32.totalorder %s31, 1
    %p395 = por %p393, %p394
    %p397 = scmp.ne.s32.totalorder %s382, %s396
    %p398 = scmp.eq.s32.totalorder %s31, 0
    %p399 = por %p397, %p398
    %s400 = ssub.s32 %s25, %s32
    %p401 = scmp.eq.s32.totalorder %s400, 0
    %s403 = sadd.s32 %s402, 1
    %s404 = scalar_select %p401, %s402, %s403
    %p407 = pneg %p401
    %p408 = scmp.eq.s32.totalorder %s25, 1
    %p409 = por %p407, %p408
    %p410 = scmp.ne.s32.totalorder %s402, %s405
    %p411 = scmp.eq.s32.totalorder %s25, 0
    %p412 = por %p410, %p411
    %p413 = scmp.ne.s32.totalorder %s402, %s405
    %p414 = scmp.eq.s32.totalorder %s30, 1
    %p415 = por %p413, %p414
    %p416 = scmp.ne.s32.totalorder %s405, %s406
    %p417 = scmp.eq.s32.totalorder %s30, 0
    %p418 = por %p416, %p417
    %p419 = scmp.ne.s32.totalorder %s405, %s406
    %p420 = scmp.eq.s32.totalorder %s31, 1
    %p421 = por %p419, %p420
    %p423 = scmp.ne.s32.totalorder %s406, %s422
    %p424 = scmp.eq.s32.totalorder %s31, 0
    %p425 = por %p423, %p424
    %p426 = scmp.le.s32.totalorder 1, %s25
    %p427 = scmp.lt.s32.totalorder %s25, 3
    %p428 = pnand %p426, %p427
    %p429 = pneg %p428
    // Predicated region
    $region9: #{tpu_custom_call.1} parent=5 // pred_check
      _
    $region10: #{tpu_custom_call.1} parent=5 // pred_check_branch
      %431 = sbr.rel (%p428) target = $region12
    $region11: #{tpu_custom_call.1} parent=5 // pred_region
      %s432 = ssub.s32 %s25, 1
      // Predicated region
      $region13: #{tpu_custom_call.1} parent=11 // pred_check
        %p433 = pneg %p98
      $region14: #{tpu_custom_call.1} parent=11 // pred_check_branch
        %435 = sbr.rel (%p433) target = $region16
      $region15: #{tpu_custom_call.1} parent=11 // pred_region
        _
      $region16: #{tpu_custom_call.1} parent=11 // pred_fallthru
        _
      // Predicated region
      $region17: #{tpu_custom_call.1} parent=11 // pred_check
        %p436 = pneg %p119
      $region18: #{tpu_custom_call.1} parent=11 // pred_check_branch
        %438 = sbr.rel (%p436) target = $region20
      $region19: #{tpu_custom_call.1} parent=11 // pred_region
        _
      $region20: #{tpu_custom_call.1} parent=11 // pred_fallthru
        _
      // Predicated region
      $region21: #{tpu_custom_call.1} parent=11 // pred_check
        %p439 = pneg %p140
      $region22: #{tpu_custom_call.1} parent=11 // pred_check_branch
        %441 = sbr.rel (%p439) target = $region24
      $region23: #{tpu_custom_call.1} parent=11 // pred_region
        _
      $region24: #{tpu_custom_call.1} parent=11 // pred_fallthru
        _
      // Predicated region
      $region25: #{tpu_custom_call.1} parent=11 // pred_check
        %p442 = pneg %p161
      $region26: #{tpu_custom_call.1} parent=11 // pred_check_branch
        %444 = sbr.rel (%p442) target = $region28
      $region27: #{tpu_custom_call.1} parent=11 // pred_region
        _
      $region28: #{tpu_custom_call.1} parent=11 // pred_fallthru
        _
      // Predicated region
      $region29: #{tpu_custom_call.1} parent=11 // pred_check
        %p445 = pneg %p182
      $region30: #{tpu_custom_call.1} parent=11 // pred_check_branch
        %447 = sbr.rel (%p445) target = $region32
      $region31: #{tpu_custom_call.1} parent=11 // pred_region
        _
      $region32: #{tpu_custom_call.1} parent=11 // pred_fallthru
        _
      // Predicated region
      $region33: #{tpu_custom_call.1} parent=11 // pred_check
        %p448 = pneg %p203
      $region34: #{tpu_custom_call.1} parent=11 // pred_check_branch
        %450 = sbr.rel (%p448) target = $region36
      $region35: #{tpu_custom_call.1} parent=11 // pred_region
        _
      $region36: #{tpu_custom_call.1} parent=11 // pred_fallthru
        _
      // Predicated region
      $region37: #{tpu_custom_call.1} parent=11 // pred_check
        %p451 = pneg %p224
      $region38: #{tpu_custom_call.1} parent=11 // pred_check_branch
        %453 = sbr.rel (%p451) target = $region40
      $region39: #{tpu_custom_call.1} parent=11 // pred_region
        _
      $region40: #{tpu_custom_call.1} parent=11 // pred_fallthru
        _
      // Predicated region
      $region41: #{tpu_custom_call.1} parent=11 // pred_check
        %p454 = pneg %p245
      $region42: #{tpu_custom_call.1} parent=11 // pred_check_branch
        %456 = sbr.rel (%p454) target = $region44
      $region43: #{tpu_custom_call.1} parent=11 // pred_region
        _
      $region44: #{tpu_custom_call.1} parent=11 // pred_fallthru
        _
      // Predicated region
      $region45: #{tpu_custom_call.1} parent=11 // pred_check
        %p457 = pneg %p266
      $region46: #{tpu_custom_call.1} parent=11 // pred_check_branch
        %459 = sbr.rel (%p457) target = $region48
      $region47: #{tpu_custom_call.1} parent=11 // pred_region
        _
      $region48: #{tpu_custom_call.1} parent=11 // pred_fallthru
        _
      // Predicated region
      $region49: #{tpu_custom_call.1} parent=11 // pred_check
        %p460 = pneg %p287
      $region50: #{tpu_custom_call.1} parent=11 // pred_check_branch
        %462 = sbr.rel (%p460) target = $region52
      $region51: #{tpu_custom_call.1} parent=11 // pred_region
        _
      $region52: #{tpu_custom_call.1} parent=11 // pred_fallthru
        _
      // Predicated region
      $region53: #{tpu_custom_call.1} parent=11 // pred_check
        %p463 = pneg %p308
      $region54: #{tpu_custom_call.1} parent=11 // pred_check_branch
        %465 = sbr.rel (%p463) target = $region56
      $region55: #{tpu_custom_call.1} parent=11 // pred_region
        _
      $region56: #{tpu_custom_call.1} parent=11 // pred_fallthru
        _
      // Predicated region
      $region57: #{tpu_custom_call.1} parent=11 // pred_check
        %p466 = pneg %p329
      $region58: #{tpu_custom_call.1} parent=11 // pred_check_branch
        %468 = sbr.rel (%p466) target = $region60
      $region59: #{tpu_custom_call.1} parent=11 // pred_region
        _
      $region60: #{tpu_custom_call.1} parent=11 // pred_fallthru
        _
      // Predicated region
      $region61: #{tpu_custom_call.1} parent=11 // pred_check
        %p469 = pneg %p350
      $region62: #{tpu_custom_call.1} parent=11 // pred_check_branch
        %471 = sbr.rel (%p469) target = $region64
      $region63: #{tpu_custom_call.1} parent=11 // pred_region
        _
      $region64: #{tpu_custom_call.1} parent=11 // pred_fallthru
        _
      // Predicated region
      $region65: #{tpu_custom_call.1} parent=11 // pred_check
        %p472 = pneg %p371
      $region66: #{tpu_custom_call.1} parent=11 // pred_check_branch
        %474 = sbr.rel (%p472) target = $region68
      $region67: #{tpu_custom_call.1} parent=11 // pred_region
        _
      $region68: #{tpu_custom_call.1} parent=11 // pred_fallthru
        _
      // Predicated region
      $region69: #{tpu_custom_call.1} parent=11 // pred_check
        %p475 = pneg %p392
      $region70: #{tpu_custom_call.1} parent=11 // pred_check_branch
        %477 = sbr.rel (%p475) target = $region72
      $region71: #{tpu_custom_call.1} parent=11 // pred_region
        _
      $region72: #{tpu_custom_call.1} parent=11 // pred_fallthru
        _
    $region12: #{tpu_custom_call.1} parent=5 // pred_fallthru
      _
    %p478 = scmp.lt.s32.totalorder %s25, 2
    // Predicated region
    $region73: #{tpu_custom_call.1} parent=5 // pred_check
      %p479 = pneg %p478
    $region74: #{tpu_custom_call.1} parent=5 // pred_check_branch
      %481 = sbr.rel (%p479) target = $region76
    $region75: #{tpu_custom_call.1} parent=5 // pred_region
      // Predicated region
      $region77: #{tpu_custom_call.1} parent=75 // pred_check
        %p482 = pneg %p45
      $region78: #{tpu_custom_call.1} parent=75 // pred_check_branch
        %484 = sbr.rel (%p482) target = $region80
      $region79: #{tpu_custom_call.1} parent=75 // pred_region
        %p485 = scmp.lt.s32.totalorder %s25, 1
        %s486 = scalar_select %p485, %s25, 1
        %s487 = smul.addr %s486, 8
        %s488 = smul.addr %s487, 8
        %s489 = scalar_lea.vmem %s0, %s488
      $region80: #{tpu_custom_call.1} parent=75 // pred_fallthru
        _
      // Predicated region
      $region81: #{tpu_custom_call.1} parent=75 // pred_check
        %p490 = pneg %p71
      $region82: #{tpu_custom_call.1} parent=75 // pred_check_branch
        %492 = sbr.rel (%p490) target = $region84
      $region83: #{tpu_custom_call.1} parent=75 // pred_region
        %p493 = scmp.lt.s32.totalorder %s25, 1
        %s494 = scalar_select %p493, %s25, 1
        %s495 = scalar_lea.vmem %s1, %s494
      $region84: #{tpu_custom_call.1} parent=75 // pred_fallthru
        _
    $region76: #{tpu_custom_call.1} parent=5 // pred_fallthru
      _
    %p496 = scmp.le.s32.totalorder 1, %s25
    %p497 = scmp.lt.s32.totalorder %s25, 3
    %p498 = pnand %p496, %p497
    %p499 = pneg %p498
    // Predicated region
    $region85: #{tpu_custom_call.1} parent=5 // pred_check
      _
    $region86: #{tpu_custom_call.1} parent=5 // pred_check_branch
      %501 = sbr.rel (%p498) target = $region88
    $region87: #{tpu_custom_call.1} parent=5 // pred_region
      %s502 = ssub.s32 %s25, 1
      %p503 = scmp.lt.s32.totalorder %s30, 1
      %s504 = scalar_select %p503, %s30, 1
      %s505 = smul.addr %s504, 8
      %s506 = smul.addr %s505, 8
      %s507 = scalar_lea.vmem %s0, %s506
      %p508 = pneg %p51
      %p509 = pneg %p48
      %p510 = scmp.lt.s32.totalorder %s30, 1
      %s511 = scalar_select %p510, %s30, 1
      %s512 = scalar_lea.vmem %s1, %s511
      %p513 = pneg %p77
      %p514 = pneg %p74
      %p515 = pneg %p98
      %p516 = pneg %p95
      %p517 = pneg %p119
      %p518 = pneg %p116
      %p519 = pneg %p140
      %p520 = pneg %p137
      %p521 = pneg %p161
      %p522 = pneg %p158
      %p523 = pneg %p182
      %p524 = pneg %p179
      %p525 = pneg %p203
      %p526 = pneg %p200
      %p527 = pneg %p224
      %p528 = pneg %p221
      %p529 = pneg %p245
      %p530 = pneg %p242
      %p531 = pneg %p266
      %p532 = pneg %p263
      %p533 = pneg %p287
      %p534 = pneg %p284
      %p535 = pneg %p308
      %p536 = pneg %p305
      %p537 = pneg %p329
      %p538 = pneg %p326
      %p539 = pneg %p350
      %p540 = pneg %p347
      %p541 = pneg %p371
      %p542 = pneg %p368
      %p543 = pneg %p392
      %p544 = pneg %p389
      %p545 = pneg %p418
      %p546 = pneg %p415
      %p547 = scmp.lt.s32.totalorder %s30, 1
      %s548 = scalar_select %p547, %s30, 1
      %s549 = smul.addr %s548, 4
      %s550 = scalar_lea.vmem %s17, %s549
      %p551 = scmp.lt.s32.totalorder %s30, 1
      %s552 = scalar_select %p551, %s30, 1
      %s553 = smul.addr %s552, 8
      %s554 = smul.addr %s553, 8
      %s555 = scalar_lea.vmem %s0, %s554
      %p556 = scmp.lt.s32.totalorder %s30, 1
      %s557 = scalar_select %p556, %s30, 1
      %s558 = scalar_lea.vmem %s1, %s557
      %p559 = scmp.lt.s32.totalorder %s30, 1
      %s560 = scalar_select %p559, %s30, 1
      %s561 = smul.addr %s560, 4
      %s562 = scalar_lea.vmem %s17, %s561
      %v563 = vld [vmem:[%s555] sm:$0xff]
      %v564 = vld [vmem:[%s555 + $0x8] sm:$0xff]
      %v565 = vld [vmem:[%s555 + $0x10] sm:$0xff]
      %v566 = vld [vmem:[%s555 + $0x18] sm:$0xff]
      %v567 = vld [vmem:[%s555 + $0x20] sm:$0xff]
      %v568 = vld [vmem:[%s555 + $0x28] sm:$0xff]
      %v569 = vld [vmem:[%s555 + $0x30] sm:$0xff]
      %v570 = vld [vmem:[%s555 + $0x38] sm:$0xff]
      %v571 = vlaneseq
      %v572 = vshrl.u32 %v571, 7
      %v573 = vadd.s32 %v572, 8
      %v574 = vadd.s32 %v572, 16
      %v575 = vadd.s32 %v572, 24
      %v576 = vadd.s32 %v572, 32
      %v577 = vadd.s32 %v572, 40
      %v578 = vadd.s32 %v572, 48
      %v579 = vadd.s32 %v572, 56
      %vm580 = vcmp.lt.s32.totalorder %v572, 0
      %v581 = vsub.s32 0, %v572
      %v582 = vsel %vm580, %v581, %v572
      %v583 = vshrl.u32 %v582, 4
      %v584 = vand.u32 %v582, 15
      %v585 = vsub.s32 0, %v584
      %v586 = vsel %vm580, %v585, %v584
      %vm587 = vcmp.lt.s32.totalorder %v573, 0
      %v588 = vsub.s32 0, %v573
      %v589 = vsel %vm587, %v588, %v573
      %v590 = vshrl.u32 %v589, 4
      %v591 = vand.u32 %v589, 15
      %v592 = vsub.s32 0, %v591
      %v593 = vsel %vm587, %v592, %v591
      %vm594 = vcmp.lt.s32.totalorder %v574, 0
      %v595 = vsub.s32 0, %v574
      %v596 = vsel %vm594, %v595, %v574
      %v597 = vshrl.u32 %v596, 4
      %v598 = vand.u32 %v596, 15
      %v599 = vsub.s32 0, %v598
      %v600 = vsel %vm594, %v599, %v598
      %vm601 = vcmp.lt.s32.totalorder %v575, 0
      %v602 = vsub.s32 0, %v575
      %v603 = vsel %vm601, %v602, %v575
      %v604 = vshrl.u32 %v603, 4
      %v605 = vand.u32 %v603, 15
      %v606 = vsub.s32 0, %v605
      %v607 = vsel %vm601, %v606, %v605
      %vm608 = vcmp.lt.s32.totalorder %v576, 0
      %v609 = vsub.s32 0, %v576
      %v610 = vsel %vm608, %v609, %v576
      %v611 = vshrl.u32 %v610, 4
      %v612 = vand.u32 %v610, 15
      %v613 = vsub.s32 0, %v612
      %v614 = vsel %vm608, %v613, %v612
      %vm615 = vcmp.lt.s32.totalorder %v577, 0
      %v616 = vsub.s32 0, %v577
      %v617 = vsel %vm615, %v616, %v577
      %v618 = vshrl.u32 %v617, 4
      %v619 = vand.u32 %v617, 15
      %v620 = vsub.s32 0, %v619
      %v621 = vsel %vm615, %v620, %v619
      %vm622 = vcmp.lt.s32.totalorder %v578, 0
      %v623 = vsub.s32 0, %v578
      %v624 = vsel %vm622, %v623, %v578
      %v625 = vshrl.u32 %v624, 4
      %v626 = vand.u32 %v624, 15
      %v627 = vsub.s32 0, %v626
      %v628 = vsel %vm622, %v627, %v626
      %vm629 = vcmp.lt.s32.totalorder %v579, 0
      %v630 = vsub.s32 0, %v579
      %v631 = vsel %vm629, %v630, %v579
      %v632 = vshrl.u32 %v631, 4
      %v633 = vand.u32 %v631, 15
      %v634 = vsub.s32 0, %v633
      %v635 = vsel %vm629, %v634, %v633
      %vm636 = vcmp.ne.s32.totalorder %v586, 0
      %vm637 = vcmp.ne.s32.totalorder %v593, 0
      %vm638 = vcmp.ne.s32.totalorder %v600, 0
      %vm639 = vcmp.ne.s32.totalorder %v607, 0
      %vm640 = vcmp.ne.s32.totalorder %v614, 0
      %vm641 = vcmp.ne.s32.totalorder %v621, 0
      %vm642 = vcmp.ne.s32.totalorder %v628, 0
      %vm643 = vcmp.ne.s32.totalorder %v635, 0
      %vm644 = vcmp.lt.s32.totalorder %v586, 0
      %vm645 = vcmp.lt.s32.totalorder %v593, 0
      %vm646 = vcmp.lt.s32.totalorder %v600, 0
      %vm647 = vcmp.lt.s32.totalorder %v607, 0
      %vm648 = vcmp.lt.s32.totalorder %v614, 0
      %vm649 = vcmp.lt.s32.totalorder %v621, 0
      %vm650 = vcmp.lt.s32.totalorder %v628, 0
      %vm651 = vcmp.lt.s32.totalorder %v635, 0
      %vm652 = vmand %vm644, %vm636
      %vm653 = vmand %vm645, %vm637
      %vm654 = vmand %vm646, %vm638
      %vm655 = vmand %vm647, %vm639
      %vm656 = vmand %vm648, %vm640
      %vm657 = vmand %vm649, %vm641
      %vm658 = vmand %vm650, %vm642
      %vm659 = vmand %vm651, %vm643
      %v660 = vadd.s32 %v586, 16
      %v661 = vadd.s32 %v593, 16
      %v662 = vadd.s32 %v600, 16
      %v663 = vadd.s32 %v607, 16
      %v664 = vadd.s32 %v614, 16
      %v665 = vadd.s32 %v621, 16
      %v666 = vadd.s32 %v628, 16
      %v667 = vadd.s32 %v635, 16
      %v668 = vsel %vm652, %v660, %v586
      %v669 = vsel %vm653, %v661, %v593
      %v670 = vsel %vm654, %v662, %v600
      %v671 = vsel %vm655, %v663, %v607
      %v672 = vsel %vm656, %v664, %v614
      %v673 = vsel %vm657, %v665, %v621
      %v674 = vsel %vm658, %v666, %v628
      %v675 = vsel %vm659, %v667, %v635
      %vm676 = vcmp.eq.s32.totalorder %v668, 0
      %vm677 = vcmp.eq.s32.totalorder %v669, 0
      %vm678 = vcmp.eq.s32.totalorder %v670, 0
      %vm679 = vcmp.eq.s32.totalorder %v671, 0
      %vm680 = vcmp.eq.s32.totalorder %v672, 0
      %vm681 = vcmp.eq.s32.totalorder %v673, 0
      %vm682 = vcmp.eq.s32.totalorder %v674, 0
      %vm683 = vcmp.eq.s32.totalorder %v675, 0
      %v684 = vrot.slane %v563, 7
      %v685 = vrot.slane %v564, 7
      %v686 = vrot.slane %v565, 7
      %v687 = vrot.slane %v566, 7
      %v688 = vrot.slane %v567, 7
      %v689 = vrot.slane %v568, 7
      %v690 = vrot.slane %v569, 7
      %v691 = vrot.slane %v570, 7
      %vm692 = vcmp.lt.s32.totalorder %v572, 1
      %v693 = vsel %vm692, %v690, %v691
      %v694 = vsel %vm692, %v689, %v690
      %v695 = vsel %vm692, %v688, %v689
      %v696 = vsel %vm692, %v687, %v688
      %v697 = vsel %vm692, %v686, %v687
      %v698 = vsel %vm692, %v685, %v686
      %v699 = vsel %vm692, %v684, %v685
      %v700 = vsel %vm692, %v691, %v684
      %v701 = vsel %vm676, 1, 0
      %v702 = vsel %vm677, 1, 0
      %v703 = vsel %vm678, 1, 0
      %v704 = vsel %vm679, 1, 0
      %v705 = vsel %vm680, 1, 0
      %v706 = vsel %vm681, 1, 0
      %v707 = vsel %vm682, 1, 0
      %v708 = vsel %vm683, 1, 0
      %vm709 = vcmp.eq.s32.totalorder %v701, 1
      %vm710 = vcmp.eq.s32.totalorder %v702, 1
      %vm711 = vcmp.eq.s32.totalorder %v703, 1
      %vm712 = vcmp.eq.s32.totalorder %v704, 1
      %vm713 = vcmp.eq.s32.totalorder %v705, 1
      %vm714 = vcmp.eq.s32.totalorder %v706, 1
      %vm715 = vcmp.eq.s32.totalorder %v707, 1
      %vm716 = vcmp.eq.s32.totalorder %v708, 1
      %v717 = vsel %vm709, 0.0, %v700
      %v718 = vsel %vm710, 0.0, %v699
      %v719 = vsel %vm711, 0.0, %v698
      %v720 = vsel %vm712, 0.0, %v697
      %v721 = vsel %vm713, 0.0, %v696
      %v722 = vsel %vm714, 0.0, %v695
      %v723 = vsel %vm715, 0.0, %v694
      %v724 = vsel %vm716, 0.0, %v693
      %vm725 = vcmp.eq.s32.totalorder %v668, 15
      %vm726 = vcmp.eq.s32.totalorder %v669, 15
      %vm727 = vcmp.eq.s32.totalorder %v670, 15
      %vm728 = vcmp.eq.s32.totalorder %v671, 15
      %vm729 = vcmp.eq.s32.totalorder %v672, 15
      %vm730 = vcmp.eq.s32.totalorder %v673, 15
      %vm731 = vcmp.eq.s32.totalorder %v674, 15
      %vm732 = vcmp.eq.s32.totalorder %v675, 15
      %v733 = vrot.slane %v563, 1
      %v734 = vrot.slane %v564, 1
      %v735 = vrot.slane %v565, 1
      %v736 = vrot.slane %v566, 1
      %v737 = vrot.slane %v567, 1
      %v738 = vrot.slane %v568, 1
      %v739 = vrot.slane %v569, 1
      %v740 = vrot.slane %v570, 1
      %vm741 = vcmp.lt.s32.totalorder %v572, 7
      %v742 = vsel %vm741, %v739, %v740
      %v743 = vsel %vm741, %v738, %v739
      %v744 = vsel %vm741, %v737, %v738
      %v745 = vsel %vm741, %v736, %v737
      %v746 = vsel %vm741, %v735, %v736
      %v747 = vsel %vm741, %v734, %v735
      %v748 = vsel %vm741, %v733, %v734
      %v749 = vsel %vm741, %v740, %v733
      %v750 = vsel %vm725, 1, 0
      %v751 = vsel %vm726, 1, 0
      %v752 = vsel %vm727, 1, 0
      %v753 = vsel %vm728, 1, 0
      %v754 = vsel %vm729, 1, 0
      %v755 = vsel %vm730, 1, 0
      %v756 = vsel %vm731, 1, 0
      %v757 = vsel %vm732, 1, 0
      %vm758 = vcmp.eq.s32.totalorder %v750, 1
      %vm759 = vcmp.eq.s32.totalorder %v751, 1
      %vm760 = vcmp.eq.s32.totalorder %v752, 1
      %vm761 = vcmp.eq.s32.totalorder %v753, 1
      %vm762 = vcmp.eq.s32.totalorder %v754, 1
      %vm763 = vcmp.eq.s32.totalorder %v755, 1
      %vm764 = vcmp.eq.s32.totalorder %v756, 1
      %vm765 = vcmp.eq.s32.totalorder %v757, 1
      %v766 = vsel %vm758, 0.0, %v748
      %v767 = vsel %vm759, 0.0, %v747
      %v768 = vsel %vm760, 0.0, %v746
      %v769 = vsel %vm761, 0.0, %v745
      %v770 = vsel %vm762, 0.0, %v744
      %v771 = vsel %vm763, 0.0, %v743
      %v772 = vsel %vm764, 0.0, %v742
      %v773 = vsel %vm765, 0.0, %v749
      %782 = vrot.lane.b32.xlu0 %v563, 2
      %v783 = vpop.permute.xlu0 %782
      %784 = vrot.lane.b32.xlu0 %v564, 2
      %v785 = vpop.permute.xlu0 %784
      %786 = vrot.lane.b32.xlu0 %v565, 2
      %v787 = vpop.permute.xlu0 %786
      %788 = vrot.lane.b32.xlu0 %v566, 2
      %v789 = vpop.permute.xlu0 %788
      %790 = vrot.lane.b32.xlu0 %v567, 2
      %v791 = vpop.permute.xlu0 %790
      %792 = vrot.lane.b32.xlu0 %v568, 2
      %v793 = vpop.permute.xlu0 %792
      %794 = vrot.lane.b32.xlu0 %v569, 2
      %v795 = vpop.permute.xlu0 %794
      %796 = vrot.lane.b32.xlu0 %v570, 2
      %v797 = vpop.permute.xlu0 %796
      %814 = vrot.lane.b32.xlu0 %v766, 4
      %v815 = vpop.permute.xlu0 %814
      %816 = vrot.lane.b32.xlu0 %v767, 4
      %v817 = vpop.permute.xlu0 %816
      %818 = vrot.lane.b32.xlu0 %v768, 4
      %v819 = vpop.permute.xlu0 %818
      %820 = vrot.lane.b32.xlu0 %v769, 4
      %v821 = vpop.permute.xlu0 %820
      %822 = vrot.lane.b32.xlu0 %v770, 4
      %v823 = vpop.permute.xlu0 %822
      %824 = vrot.lane.b32.xlu0 %v771, 4
      %v825 = vpop.permute.xlu0 %824
      %826 = vrot.lane.b32.xlu0 %v772, 4
      %v827 = vpop.permute.xlu0 %826
      %828 = vrot.lane.b32.xlu0 %v773, 4
      %v829 = vpop.permute.xlu0 %828
      %vm838 = vcmask 15360
      %v839 = vsel %vm838, %v717, %v783
      %v840 = vsel %vm838, %v718, %v785
      %v841 = vsel %vm838, %v719, %v787
      %v842 = vsel %vm838, %v720, %v789
      %v843 = vsel %vm838, %v721, %v791
      %v844 = vsel %vm838, %v722, %v793
      %v845 = vsel %vm838, %v723, %v795
      %v846 = vsel %vm838, %v724, %v797
      %vm847 = vcmask 31744
      %v848 = vsel %vm847, %v839, %v815
      %v849 = vsel %vm847, %v840, %v817
      %v850 = vsel %vm847, %v841, %v819
      %v851 = vsel %vm847, %v842, %v821
      %v852 = vsel %vm847, %v843, %v823
      %v853 = vsel %vm847, %v844, %v825
      %v854 = vsel %vm847, %v845, %v827
      %v855 = vsel %vm847, %v846, %v829
      %v856 = vld [vmem:[%s2] sm:$0x3f]
      %v857 = vld [vmem:[%s3] sm:$0x1]
      %v859 = vlaneseq
      %v860 = vshrl.u32 %v859, 7
      %v861 = vsub.s32 0, %v860
      %v862 = vrot.slane %v857, %v861
      %vm864 = vcmask 48128
      %v866 = vsel %vm864, %v848, 0
      %v869 = vsel %vm864, %v849, 0
      %v872 = vsel %vm864, %v850, 0
      %v875 = vsel %vm864, %v851, 0
      %v878 = vsel %vm864, %v852, 0
      %v881 = vsel %vm864, %v853, 0
      %v884 = vsel %vm864, %v854, 0
      %v887 = vsel %vm864, %v855, 0
      %vm889 = vcmask 1045504
      %v891 = vsel %vm889, %v856, 0
      %893 = vmatprep.subr.mxu0 0.0
      %894 = vmatpush1.msra.mxu0 %v891
      %895 = vmatprep.subr.mxu0 0.0
      %896 = vmatpush1.msra.mxu0 0.0
      %897 = vmatprep.subr.mxu0 0.0
      %898 = vmatpush1.msra.mxu0 0.0
      %899 = vmatprep.subr.mxu0 0.0
      %900 = vmatpush1.msra.mxu0 0.0
      %901 = vmatprep.subr.mxu0 0.0
      %902 = vmatpush1.msra.mxu0 0.0
      %903 = vmatprep.subr.mxu0 0.0
      %904 = vmatpush1.msra.mxu0 0.0
      %905 = vmatprep.subr.mxu0 0.0
      %906 = vmatpush1.msra.mxu0 0.0
      %907 = vmatprep.subr.mxu0 0.0
      %908 = vmatpush1.msra.mxu0 0.0
      %909 = vmatprep.subr.mxu0 0.0
      %910 = vmatpush1.msra.mxu0 0.0
      %911 = vmatprep.subr.mxu0 0.0
      %912 = vmatpush1.msra.mxu0 0.0
      %913 = vmatprep.subr.mxu0 0.0
      %914 = vmatpush1.msra.mxu0 0.0
      %915 = vmatprep.subr.mxu0 0.0
      %916 = vmatpush1.msra.mxu0 0.0
      %917 = vmatprep.subr.mxu0 0.0
      %918 = vmatpush1.msra.mxu0 0.0
      %919 = vmatprep.subr.mxu0 0.0
      %920 = vmatpush1.msra.mxu0 0.0
      %921 = vmatprep.subr.mxu0 0.0
      %922 = vmatpush1.msra.mxu0 0.0
      %923 = vmatprep.subr.mxu0 0.0
      %924 = vmatpush1.msra.mxu0 0.0
      %925 = vmatprep.subr.mxu0 0.0
      %926 = vmatpush1.msra.mxu0 0.0
      %927 = vmatprep.subr.mxu0 0.0
      %928 = vmatpush1.msra.mxu0 0.0
      %929 = vmatprep.subr.mxu0 0.0
      %930 = vmatpush1.msra.mxu0 0.0
      %931 = vmatprep.subr.mxu0 0.0
      %932 = vmatpush1.msra.mxu0 0.0
      %933 = vmatprep.subr.mxu0 0.0
      %934 = vmatpush1.msra.mxu0 0.0
      %935 = vmatprep.subr.mxu0 0.0
      %936 = vmatpush1.msra.mxu0 0.0
      %937 = vmatprep.subr.mxu0 0.0
      %938 = vmatpush1.msra.mxu0 0.0
      %939 = vmatprep.subr.mxu0 0.0
      %940 = vmatpush1.msra.mxu0 0.0
      %941 = vmatprep.subr.mxu0 0.0
      %942 = vmatpush1.msra.mxu0 0.0
      %943 = vmatprep.subr.mxu0 0.0
      %944 = vmatpush1.msra.mxu0 0.0
      %945 = vmatprep.subr.mxu0 0.0
      %946 = vmatpush1.msra.mxu0 0.0
      %947 = vmatprep.subr.mxu0 0.0
      %948 = vmatpush1.msra.mxu0 0.0
      %949 = vmatprep.subr.mxu0 0.0
      %950 = vmatpush1.msra.mxu0 0.0
      %951 = vmatprep.subr.mxu0 0.0
      %952 = vmatpush1.msra.mxu0 0.0
      %953 = vmatprep.subr.mxu0 0.0
      %954 = vmatpush1.msra.mxu0 0.0
      %955 = vmatprep.subr.mxu0 0.0
      %956 = vmatpush1.msra.mxu0 0.0
      %957 = vmatprep.mubr.f32.mxu0 0.0
      %958 = vmatmul.mubr.f32.gmra.mrb[0].mxu0 %v866
      %v959 = vpop.f32.mrb[0].mxu0
      %v960 = vadd.f32 %v862, %v959
      %v961 = vpop.f32.mrb[0].mxu0
      %962 = vmatprep.mubr.f32.mxu0 0.0
      %963 = vmatmul.mubr.f32.gmra.mrb[0].mxu0 %v869
      %v964 = vpop.f32.mrb[0].mxu0
      %v965 = vadd.f32 %v862, %v964
      %v966 = vpop.f32.mrb[0].mxu0
      %967 = vmatprep.mubr.f32.mxu0 0.0
      %968 = vmatmul.mubr.f32.gmra.mrb[0].mxu0 %v872
      %v969 = vpop.f32.mrb[0].mxu0
      %v970 = vadd.f32 %v862, %v969
      %v971 = vpop.f32.mrb[0].mxu0
      %972 = vmatprep.mubr.f32.mxu0 0.0
      %973 = vmatmul.mubr.f32.gmra.mrb[0].mxu0 %v875
      %v974 = vpop.f32.mrb[0].mxu0
      %v975 = vadd.f32 %v862, %v974
      %v976 = vpop.f32.mrb[0].mxu0
      %977 = vmatprep.mubr.f32.mxu0 0.0
      %978 = vmatmul.mubr.f32.gmra.mrb[0].mxu0 %v878
      %v979 = vpop.f32.mrb[0].mxu0
      %v980 = vadd.f32 %v862, %v979
      %v981 = vpop.f32.mrb[0].mxu0
      %982 = vmatprep.mubr.f32.mxu0 0.0
      %983 = vmatmul.mubr.f32.gmra.mrb[0].mxu0 %v881
      %v984 = vpop.f32.mrb[0].mxu0
      %v985 = vadd.f32 %v862, %v984
      %v986 = vpop.f32.mrb[0].mxu0
      %987 = vmatprep.mubr.f32.mxu0 0.0
      %988 = vmatmul.mubr.f32.gmra.mrb[0].mxu0 %v884
      %v989 = vpop.f32.mrb[0].mxu0
      %v990 = vadd.f32 %v862, %v989
      %v991 = vpop.f32.mrb[0].mxu0
      %992 = vmatprep.mubr.f32.mxu0 0.0
      %993 = vmatmul.mubr.f32.gmra.mrb[0].mxu0 %v887
      %v994 = vpop.f32.mrb[0].mxu0
      %v995 = vadd.f32 %v862, %v994
      %v996 = vpop.f32.mrb[0].mxu0
      %997 = vdwg.mxu0
      %v998 = vmax.f32 %v960, 0.0
      %v999 = vmax.f32 %v965, 0.0
      %v1000 = vmax.f32 %v970, 0.0
      %v1001 = vmax.f32 %v975, 0.0
      %v1002 = vmax.f32 %v980, 0.0
      %v1003 = vmax.f32 %v985, 0.0
      %v1004 = vmax.f32 %v990, 0.0
      %v1005 = vmax.f32 %v995, 0.0
      %v1006 = vrot.slane %v998, 7
      %v1007 = vrot.slane %v999, 7
      %v1008 = vrot.slane %v1000, 7
      %v1009 = vrot.slane %v1001, 7
      %v1010 = vrot.slane %v1002, 7
      %v1011 = vrot.slane %v1003, 7
      %v1012 = vrot.slane %v1004, 7
      %v1013 = vrot.slane %v1005, 7
      %v1014 = vsel %vm692, %v1012, %v1013
      %v1015 = vsel %vm692, %v1011, %v1012
      %v1016 = vsel %vm692, %v1010, %v1011
      %v1017 = vsel %vm692, %v1009, %v1010
      %v1018 = vsel %vm692, %v1008, %v1009
      %v1019 = vsel %vm692, %v1007, %v1008
      %v1020 = vsel %vm692, %v1006, %v1007
      %v1021 = vsel %vm692, %v1013, %v1006
      %v1022 = vsel %vm709, 0.0, %v1021
      %v1023 = vsel %vm710, 0.0, %v1020
      %v1024 = vsel %vm711, 0.0, %v1019
      %v1025 = vsel %vm712, 0.0, %v1018
      %v1026 = vsel %vm713, 0.0, %v1017
      %v1027 = vsel %vm714, 0.0, %v1016
      %v1028 = vsel %vm715, 0.0, %v1015
      %v1029 = vsel %vm716, 0.0, %v1014
      %v1030 = vrot.slane %v998, 1
      %v1031 = vrot.slane %v999, 1
      %v1032 = vrot.slane %v1000, 1
      %v1033 = vrot.slane %v1001, 1
      %v1034 = vrot.slane %v1002, 1
      %v1035 = vrot.slane %v1003, 1
      %v1036 = vrot.slane %v1004, 1
      %v1037 = vrot.slane %v1005, 1
      %v1038 = vsel %vm741, %v1036, %v1037
      %v1039 = vsel %vm741, %v1035, %v1036
      %v1040 = vsel %vm741, %v1034, %v1035
      %v1041 = vsel %vm741, %v1033, %v1034
      %v1042 = vsel %vm741, %v1032, %v1033
      %v1043 = vsel %vm741, %v1031, %v1032
      %v1044 = vsel %vm741, %v1030, %v1031
      %v1045 = vsel %vm741, %v1037, %v1030
      %v1046 = vsel %vm758, 0.0, %v1044
      %v1047 = vsel %vm759, 0.0, %v1043
      %v1048 = vsel %vm760, 0.0, %v1042
      %v1049 = vsel %vm761, 0.0, %v1041
      %v1050 = vsel %vm762, 0.0, %v1040
      %v1051 = vsel %vm763, 0.0, %v1039
      %v1052 = vsel %vm764, 0.0, %v1038
      %v1053 = vsel %vm765, 0.0, %v1045
      %1062 = vrot.lane.b32.xlu0 %v998, 32
      %v1063 = vpop.permute.xlu0 %1062
      %1064 = vrot.lane.b32.xlu0 %v999, 32
      %v1065 = vpop.permute.xlu0 %1064
      %1066 = vrot.lane.b32.xlu0 %v1000, 32
      %v1067 = vpop.permute.xlu0 %1066
      %1068 = vrot.lane.b32.xlu0 %v1001, 32
      %v1069 = vpop.permute.xlu0 %1068
      %1070 = vrot.lane.b32.xlu0 %v1002, 32
      %v1071 = vpop.permute.xlu0 %1070
      %1072 = vrot.lane.b32.xlu0 %v1003, 32
      %v1073 = vpop.permute.xlu0 %1072
      %1074 = vrot.lane.b32.xlu0 %v1004, 32
      %v1075 = vpop.permute.xlu0 %1074
      %1076 = vrot.lane.b32.xlu0 %v1005, 32
      %v1077 = vpop.permute.xlu0 %1076
      %1094 = vrot.lane.b32.xlu0 %v1046, 64
      %v1095 = vpop.permute.xlu0 %1094
      %1096 = vrot.lane.b32.xlu0 %v1047, 64
      %v1097 = vpop.permute.xlu0 %1096
      %1098 = vrot.lane.b32.xlu0 %v1048, 64
      %v1099 = vpop.permute.xlu0 %1098
      %1100 = vrot.lane.b32.xlu0 %v1049, 64
      %v1101 = vpop.permute.xlu0 %1100
      %1102 = vrot.lane.b32.xlu0 %v1050, 64
      %v1103 = vpop.permute.xlu0 %1102
      %1104 = vrot.lane.b32.xlu0 %v1051, 64
      %v1105 = vpop.permute.xlu0 %1104
      %1106 = vrot.lane.b32.xlu0 %v1052, 64
      %v1107 = vpop.permute.xlu0 %1106
      %1108 = vrot.lane.b32.xlu0 %v1053, 64
      %v1109 = vpop.permute.xlu0 %1108
      %vm1118 = vcmask 261120
      %v1119 = vsel %vm1118, %v1022, %v1063
      %v1120 = vsel %vm1118, %v1023, %v1065
      %v1121 = vsel %vm1118, %v1024, %v1067
      %v1122 = vsel %vm1118, %v1025, %v1069
      %v1123 = vsel %vm1118, %v1026, %v1071
      %v1124 = vsel %vm1118, %v1027, %v1073
      %v1125 = vsel %vm1118, %v1028, %v1075
      %v1126 = vsel %vm1118, %v1029, %v1077
      %vm1127 = vcmask 523264
      %v1128 = vsel %vm1127, %v1119, %v1095
      %v1129 = vsel %vm1127, %v1120, %v1097
      %v1130 = vsel %vm1127, %v1121, %v1099
      %v1131 = vsel %vm1127, %v1122, %v1101
      %v1132 = vsel %vm1127, %v1123, %v1103
      %v1133 = vsel %vm1127, %v1124, %v1105
      %v1134 = vsel %vm1127, %v1125, %v1107
      %v1135 = vsel %vm1127, %v1126, %v1109
      %v1136 = vld [vmem:[%s4] sm:$0xff]
      %v1137 = vld [vmem:[%s4 + $0x8] sm:$0xff]
      %v1138 = vld [vmem:[%s4 + $0x10] sm:$0xff]
      %v1139 = vld [vmem:[%s4 + $0x18] sm:$0xff]
      %v1140 = vld [vmem:[%s4 + $0x20] sm:$0xff]
      %v1141 = vld [vmem:[%s4 + $0x28] sm:$0xff]
      %v1142 = vld [vmem:[%s4 + $0x30] sm:$0xff]
      %v1143 = vld [vmem:[%s4 + $0x38] sm:$0xff]
      %v1144 = vld [vmem:[%s4 + $0x40] sm:$0xff]
      %v1145 = vld [vmem:[%s4 + $0x48] sm:$0xff]
      %v1146 = vld [vmem:[%s4 + $0x50] sm:$0xff]
      %v1147 = vld [vmem:[%s4 + $0x58] sm:$0xff]
      %v1148 = vld [vmem:[%s5] sm:$0x1]
      %v1150 = vlaneseq
      %v1151 = vshrl.u32 %v1150, 7
      %v1152 = vsub.s32 0, %v1151
      %v1153 = vrot.slane %v1148, %v1152
      %vm1155 = vcmask 785408
      %v1157 = vsel %vm1155, %v1128, 0
      %v1160 = vsel %vm1155, %v1129, 0
      %v1163 = vsel %vm1155, %v1130, 0
      %v1166 = vsel %vm1155, %v1131, 0
      %v1169 = vsel %vm1155, %v1132, 0
      %v1172 = vsel %vm1155, %v1133, 0
      %v1175 = vsel %vm1155, %v1134, 0
      %v1178 = vsel %vm1155, %v1135, 0
      %1180 = vmatprep.subr.mxu0 0.0
      %1181 = vmatpush1.msra.mxu0 %v1136
      %1182 = vmatprep.subr.mxu0 0.0
      %1183 = vmatpush1.msra.mxu0 %v1137
      %1184 = vmatprep.subr.mxu0 0.0
      %1185 = vmatpush1.msra.mxu0 %v1138
      %1186 = vmatprep.subr.mxu0 0.0
      %1187 = vmatpush1.msra.mxu0 %v1139
      %1188 = vmatprep.subr.mxu0 0.0
      %1189 = vmatpush1.msra.mxu0 %v1140
      %1190 = vmatprep.subr.mxu0 0.0
      %1191 = vmatpush1.msra.mxu0 %v1141
      %1192 = vmatprep.subr.mxu0 0.0
      %1193 = vmatpush1.msra.mxu0 %v1142
      %1194 = vmatprep.subr.mxu0 0.0
      %1195 = vmatpush1.msra.mxu0 %v1143
      %1196 = vmatprep.subr.mxu0 0.0
      %1197 = vmatpush1.msra.mxu0 %v1144
      %1198 = vmatprep.subr.mxu0 0.0
      %1199 = vmatpush1.msra.mxu0 %v1145
      %1200 = vmatprep.subr.mxu0 0.0
      %1201 = vmatpush1.msra.mxu0 %v1146
      %1202 = vmatprep.subr.mxu0 0.0
      %1203 = vmatpush1.msra.mxu0 %v1147
      %1204 = vmatprep.subr.mxu0 0.0
      %1205 = vmatpush1.msra.mxu0 0.0
      %1206 = vmatprep.subr.mxu0 0.0
      %1207 = vmatpush1.msra.mxu0 0.0
      %1208 = vmatprep.subr.mxu0 0.0
      %1209 = vmatpush1.msra.mxu0 0.0
      %1210 = vmatprep.subr.mxu0 0.0
      %1211 = vmatpush1.msra.mxu0 0.0
      %1212 = vmatprep.subr.mxu0 0.0
      %1213 = vmatpush1.msra.mxu0 0.0
      %1214 = vmatprep.subr.mxu0 0.0
      %1215 = vmatpush1.msra.mxu0 0.0
      %1216 = vmatprep.subr.mxu0 0.0
      %1217 = vmatpush1.msra.mxu0 0.0
      %1218 = vmatprep.subr.mxu0 0.0
      %1219 = vmatpush1.msra.mxu0 0.0
      %1220 = vmatprep.subr.mxu0 0.0
      %1221 = vmatpush1.msra.mxu0 0.0
      %1222 = vmatprep.subr.mxu0 0.0
      %1223 = vmatpush1.msra.mxu0 0.0
      %1224 = vmatprep.subr.mxu0 0.0
      %1225 = vmatpush1.msra.mxu0 0.0
      %1226 = vmatprep.subr.mxu0 0.0
      %1227 = vmatpush1.msra.mxu0 0.0
      %1228 = vmatprep.subr.mxu0 0.0
      %1229 = vmatpush1.msra.mxu0 0.0
      %1230 = vmatprep.subr.mxu0 0.0
      %1231 = vmatpush1.msra.mxu0 0.0
      %1232 = vmatprep.subr.mxu0 0.0
      %1233 = vmatpush1.msra.mxu0 0.0
      %1234 = vmatprep.subr.mxu0 0.0
      %1235 = vmatpush1.msra.mxu0 0.0
      %1236 = vmatprep.subr.mxu0 0.0
      %1237 = vmatpush1.msra.mxu0 0.0
      %1238 = vmatprep.subr.mxu0 0.0
      %1239 = vmatpush1.msra.mxu0 0.0
      %1240 = vmatprep.subr.mxu0 0.0
      %1241 = vmatpush1.msra.mxu0 0.0
      %1242 = vmatprep.subr.mxu0 0.0
      %1243 = vmatpush1.msra.mxu0 0.0
      %1244 = vmatprep.mubr.f32.mxu0 0.0
      %1245 = vmatmul.mubr.f32.gmra.mrb[0].mxu0 %v1157
      %v1246 = vpop.f32.mrb[0].mxu0
      %v1247 = vadd.f32 %v1153, %v1246
      %v1248 = vpop.f32.mrb[0].mxu0
      %1249 = vmatprep.mubr.f32.mxu0 0.0
      %1250 = vmatmul.mubr.f32.gmra.mrb[0].mxu0 %v1160
      %v1251 = vpop.f32.mrb[0].mxu0
      %v1252 = vadd.f32 %v1153, %v1251
      %v1253 = vpop.f32.mrb[0].mxu0
      %1254 = vmatprep.mubr.f32.mxu0 0.0
      %1255 = vmatmul.mubr.f32.gmra.mrb[0].mxu0 %v1163
      %v1256 = vpop.f32.mrb[0].mxu0
      %v1257 = vadd.f32 %v1153, %v1256
      %v1258 = vpop.f32.mrb[0].mxu0
      %1259 = vmatprep.mubr.f32.mxu0 0.0
      %1260 = vmatmul.mubr.f32.gmra.mrb[0].mxu0 %v1166
      %v1261 = vpop.f32.mrb[0].mxu0
      %v1262 = vadd.f32 %v1153, %v1261
      %v1263 = vpop.f32.mrb[0].mxu0
      %1264 = vmatprep.mubr.f32.mxu0 0.0
      %1265 = vmatmul.mubr.f32.gmra.mrb[0].mxu0 %v1169
      %v1266 = vpop.f32.mrb[0].mxu0
      %v1267 = vadd.f32 %v1153, %v1266
      %v1268 = vpop.f32.mrb[0].mxu0
      %1269 = vmatprep.mubr.f32.mxu0 0.0
      %1270 = vmatmul.mubr.f32.gmra.mrb[0].mxu0 %v1172
      %v1271 = vpop.f32.mrb[0].mxu0
      %v1272 = vadd.f32 %v1153, %v1271
      %v1273 = vpop.f32.mrb[0].mxu0
      %1274 = vmatprep.mubr.f32.mxu0 0.0
      %1275 = vmatmul.mubr.f32.gmra.mrb[0].mxu0 %v1175
      %v1276 = vpop.f32.mrb[0].mxu0
      %v1277 = vadd.f32 %v1153, %v1276
      %v1278 = vpop.f32.mrb[0].mxu0
      %1279 = vmatprep.mubr.f32.mxu0 0.0
      %1280 = vmatmul.mubr.f32.gmra.mrb[0].mxu0 %v1178
      %v1281 = vpop.f32.mrb[0].mxu0
      %v1282 = vadd.f32 %v1153, %v1281
      %v1283 = vpop.f32.mrb[0].mxu0
      %1284 = vdwg.mxu0
      %v1285 = vmax.f32 %v1247, 0.0
      %v1286 = vmax.f32 %v1252, 0.0
      %v1287 = vmax.f32 %v1257, 0.0
      %v1288 = vmax.f32 %v1262, 0.0
      %v1289 = vmax.f32 %v1267, 0.0
      %v1290 = vmax.f32 %v1272, 0.0
      %v1291 = vmax.f32 %v1277, 0.0
      %v1292 = vmax.f32 %v1282, 0.0
      %v1293 = vsel %vm1118, %v1285, 0.0
      %v1294 = vsel %vm1118, %v1286, 0.0
      %v1295 = vadd.f32 %v1293, %v1294
      %v1296 = vrot.slane %v1295, 4
      %v1297 = vadd.f32 %v1295, %v1296
      %v1298 = vrot.slane %v1297, 2
      %v1299 = vadd.f32 %v1297, %v1298
      %v1300 = vrot.slane %v1299, 1
      %v1301 = vadd.f32 %v1299, %v1300
      %v1302 = vsel %vm1118, %v1287, 0.0
      %v1303 = vsel %vm1118, %v1288, 0.0
      %v1304 = vadd.f32 %v1302, %v1303
      %v1305 = vrot.slane %v1304, 4
      %v1306 = vadd.f32 %v1304, %v1305
      %v1307 = vrot.slane %v1306, 2
      %v1308 = vadd.f32 %v1306, %v1307
      %v1309 = vrot.slane %v1308, 1
      %v1310 = vadd.f32 %v1308, %v1309
      %v1311 = vsel %vm1118, %v1289, 0.0
      %v1312 = vsel %vm1118, %v1290, 0.0
      %v1313 = vadd.f32 %v1311, %v1312
      %v1314 = vrot.slane %v1313, 4
      %v1315 = vadd.f32 %v1313, %v1314
      %v1316 = vrot.slane %v1315, 2
      %v1317 = vadd.f32 %v1315, %v1316
      %v1318 = vrot.slane %v1317, 1
      %v1319 = vadd.f32 %v1317, %v1318
      %v1320 = vsel %vm1118, %v1291, 0.0
      %v1321 = vsel %vm1118, %v1292, 0.0
      %v1322 = vadd.f32 %v1320, %v1321
      %v1323 = vrot.slane %v1322, 4
      %v1324 = vadd.f32 %v1322, %v1323
      %v1325 = vrot.slane %v1324, 2
      %v1326 = vadd.f32 %v1324, %v1325
      %v1327 = vrot.slane %v1326, 1
      %v1328 = vadd.f32 %v1326, %v1327
      %v1329 = vrcp.pop 16.0
      %v1330 = vmul.f32 %v1301, %v1329
      %v1331 = vmul.f32 %v1310, %v1329
      %v1332 = vmul.f32 %v1319, %v1329
      %v1333 = vmul.f32 %v1328, %v1329
      %v1334 = vld [vmem:[%s558] sm:$0x1]
      %v1335 = vld [vmem:[%s6] sm:$0xff]
      %v1336 = vld [vmem:[%s6 + $0x8] sm:$0xff]
      %v1337 = vld [vmem:[%s6 + $0x10] sm:$0xff]
      %v1338 = vld [vmem:[%s6 + $0x18] sm:$0xff]
      %v1339 = vld [vmem:[%s7] sm:$0x1]
      %v1341 = vsel %vm1118, %v1334, 0
      %1343 = vmatprep.subr.mxu0 0.0
      %1344 = vmatpush1.msra.mxu0 %v1335
      %1345 = vmatprep.subr.mxu0 0.0
      %1346 = vmatpush1.msra.mxu0 %v1336
      %1347 = vmatprep.subr.mxu0 0.0
      %1348 = vmatpush1.msra.mxu0 %v1337
      %1349 = vmatprep.subr.mxu0 0.0
      %1350 = vmatpush1.msra.mxu0 %v1338
      %1351 = vmatprep.subr.mxu0 0.0
      %1352 = vmatpush1.msra.mxu0 0.0
      %1353 = vmatprep.subr.mxu0 0.0
      %1354 = vmatpush1.msra.mxu0 0.0
      %1355 = vmatprep.subr.mxu0 0.0
      %1356 = vmatpush1.msra.mxu0 0.0
      %1357 = vmatprep.subr.mxu0 0.0
      %1358 = vmatpush1.msra.mxu0 0.0
      %1359 = vmatprep.subr.mxu0 0.0
      %1360 = vmatpush1.msra.mxu0 0.0
      %1361 = vmatprep.subr.mxu0 0.0
      %1362 = vmatpush1.msra.mxu0 0.0
      %1363 = vmatprep.subr.mxu0 0.0
      %1364 = vmatpush1.msra.mxu0 0.0
      %1365 = vmatprep.subr.mxu0 0.0
      %1366 = vmatpush1.msra.mxu0 0.0
      %1367 = vmatprep.subr.mxu0 0.0
      %1368 = vmatpush1.msra.mxu0 0.0
      %1369 = vmatprep.subr.mxu0 0.0
      %1370 = vmatpush1.msra.mxu0 0.0
      %1371 = vmatprep.subr.mxu0 0.0
      %1372 = vmatpush1.msra.mxu0 0.0
      %1373 = vmatprep.subr.mxu0 0.0
      %1374 = vmatpush1.msra.mxu0 0.0
      %1375 = vmatprep.subr.mxu0 0.0
      %1376 = vmatpush1.msra.mxu0 0.0
      %1377 = vmatprep.subr.mxu0 0.0
      %1378 = vmatpush1.msra.mxu0 0.0
      %1379 = vmatprep.subr.mxu0 0.0
      %1380 = vmatpush1.msra.mxu0 0.0
      %1381 = vmatprep.subr.mxu0 0.0
      %1382 = vmatpush1.msra.mxu0 0.0
      %1383 = vmatprep.subr.mxu0 0.0
      %1384 = vmatpush1.msra.mxu0 0.0
      %1385 = vmatprep.subr.mxu0 0.0
      %1386 = vmatpush1.msra.mxu0 0.0
      %1387 = vmatprep.subr.mxu0 0.0
      %1388 = vmatpush1.msra.mxu0 0.0
      %1389 = vmatprep.subr.mxu0 0.0
      %1390 = vmatpush1.msra.mxu0 0.0
      %1391 = vmatprep.subr.mxu0 0.0
      %1392 = vmatpush1.msra.mxu0 0.0
      %1393 = vmatprep.subr.mxu0 0.0
      %1394 = vmatpush1.msra.mxu0 0.0
      %1395 = vmatprep.subr.mxu0 0.0
      %1396 = vmatpush1.msra.mxu0 0.0
      %1397 = vmatprep.subr.mxu0 0.0
      %1398 = vmatpush1.msra.mxu0 0.0
      %1399 = vmatprep.subr.mxu0 0.0
      %1400 = vmatpush1.msra.mxu0 0.0
      %1401 = vmatprep.subr.mxu0 0.0
      %1402 = vmatpush1.msra.mxu0 0.0
      %1403 = vmatprep.subr.mxu0 0.0
      %1404 = vmatpush1.msra.mxu0 0.0
      %1405 = vmatprep.subr.mxu0 0.0
      %1406 = vmatpush1.msra.mxu0 0.0
      %1407 = vmatprep.mubr.f32.mxu0 0.0
      %1408 = vmatmul.mubr.f32.gmra.mrb[0].mxu0 %v1341
      %v1409 = vpop.f32.mrb[0].mxu0
      %v1410 = vadd.f32 %v1339, %v1409
      %v1411 = vpop.f32.mrb[0].mxu0
      %1412 = vdwg.mxu0
      %v1413 = vmax.f32 %v1410, 0.0
      %v1414 = vld [vmem:[%s8] sm:$0xff]
      %v1415 = vld [vmem:[%s8 + $0x8] sm:$0xff]
      %v1416 = vld [vmem:[%s8 + $0x10] sm:$0xff]
      %v1417 = vld [vmem:[%s8 + $0x18] sm:$0xff]
      %v1418 = vld [vmem:[%s9] sm:$0xff]
      %v1419 = vld [vmem:[%s9 + $0x8] sm:$0xff]
      %v1420 = vld [vmem:[%s9 + $0x10] sm:$0xff]
      %v1421 = vld [vmem:[%s9 + $0x18] sm:$0xff]
      %v1423 = vsel %vm1118, %v1413, 0
      %1425 = vmatprep.subr.mxu0 0.0
      %1426 = vmatpush1.msra.mxu0 %v1418
      %1427 = vmatprep.subr.mxu0 0.0
      %1428 = vmatpush1.msra.mxu0 %v1419
      %1429 = vmatprep.subr.mxu0 0.0
      %1430 = vmatpush1.msra.mxu0 %v1420
      %1431 = vmatprep.subr.mxu0 0.0
      %1432 = vmatpush1.msra.mxu0 %v1421
      %1433 = vmatprep.subr.mxu0 0.0
      %1434 = vmatpush1.msra.mxu0 0.0
      %1435 = vmatprep.subr.mxu0 0.0
      %1436 = vmatpush1.msra.mxu0 0.0
      %1437 = vmatprep.subr.mxu0 0.0
      %1438 = vmatpush1.msra.mxu0 0.0
      %1439 = vmatprep.subr.mxu0 0.0
      %1440 = vmatpush1.msra.mxu0 0.0
      %1441 = vmatprep.subr.mxu0 0.0
      %1442 = vmatpush1.msra.mxu0 0.0
      %1443 = vmatprep.subr.mxu0 0.0
      %1444 = vmatpush1.msra.mxu0 0.0
      %1445 = vmatprep.subr.mxu0 0.0
      %1446 = vmatpush1.msra.mxu0 0.0
      %1447 = vmatprep.subr.mxu0 0.0
      %1448 = vmatpush1.msra.mxu0 0.0
      %1449 = vmatprep.subr.mxu0 0.0
      %1450 = vmatpush1.msra.mxu0 0.0
      %1451 = vmatprep.subr.mxu0 0.0
      %1452 = vmatpush1.msra.mxu0 0.0
      %1453 = vmatprep.subr.mxu0 0.0
      %1454 = vmatpush1.msra.mxu0 0.0
      %1455 = vmatprep.subr.mxu0 0.0
      %1456 = vmatpush1.msra.mxu0 0.0
      %1457 = vmatprep.subr.mxu0 0.0
      %1458 = vmatpush1.msra.mxu0 0.0
      %1459 = vmatprep.subr.mxu0 0.0
      %1460 = vmatpush1.msra.mxu0 0.0
      %1461 = vmatprep.subr.mxu0 0.0
      %1462 = vmatpush1.msra.mxu0 0.0
      %1463 = vmatprep.subr.mxu0 0.0
      %1464 = vmatpush1.msra.mxu0 0.0
      %1465 = vmatprep.subr.mxu0 0.0
      %1466 = vmatpush1.msra.mxu0 0.0
      %1467 = vmatprep.subr.mxu0 0.0
      %1468 = vmatpush1.msra.mxu0 0.0
      %1469 = vmatprep.subr.mxu0 0.0
      %1470 = vmatpush1.msra.mxu0 0.0
      %1471 = vmatprep.subr.mxu0 0.0
      %1472 = vmatpush1.msra.mxu0 0.0
      %1473 = vmatprep.subr.mxu0 0.0
      %1474 = vmatpush1.msra.mxu0 0.0
      %1475 = vmatprep.subr.mxu0 0.0
      %1476 = vmatpush1.msra.mxu0 0.0
      %1477 = vmatprep.subr.mxu0 0.0
      %1478 = vmatpush1.msra.mxu0 0.0
      %1479 = vmatprep.subr.mxu0 0.0
      %1480 = vmatpush1.msra.mxu0 0.0
      %1481 = vmatprep.subr.mxu0 0.0
      %1482 = vmatpush1.msra.mxu0 0.0
      %1483 = vmatprep.subr.mxu0 0.0
      %1484 = vmatpush1.msra.mxu0 0.0
      %1485 = vmatprep.subr.mxu0 0.0
      %1486 = vmatpush1.msra.mxu0 0.0
      %1487 = vmatprep.subr.mxu0 0.0
      %1488 = vmatpush1.msra.mxu0 0.0
      %1489 = vmatprep.mubr.f32.mxu0 0.0
      %1490 = vmatmul.mubr.f32.gmra.mrb[0].mxu0 %v1423
      %v1491 = vpop.f32.mrb[0].mxu0
      %v1492 = vadd.f32 0.0, %v1491
      %v1493 = vpop.f32.mrb[0].mxu0
      %1494 = vdwg.mxu0
      %v1495 = vlaneseq
      %v1496 = vshrl.u32 %v1495, 7
      %v1497 = vsub.s32 0, %v1496
      %v1498 = vrot.slane %v1492, %v1497
      %vm1503 = vcmask 1041409
      %v1504 = vsel %vm1503, %v1331, %v1330
      %vm1505 = vcmask 1042434
      %v1506 = vsel %vm1505, %v1332, %v1504
      %vm1507 = vcmask 1043459
      %v1508 = vsel %vm1507, %v1333, %v1506
      %v1509 = vsel %vm1118, %v1508, 0
      %1511 = vmatprep.subr.mxu0 0.0
      %1512 = vmatpush1.msra.mxu0 %v1414
      %1513 = vmatprep.subr.mxu0 0.0
      %1514 = vmatpush1.msra.mxu0 %v1415
      %1515 = vmatprep.subr.mxu0 0.0
      %1516 = vmatpush1.msra.mxu0 %v1416
      %1517 = vmatprep.subr.mxu0 0.0
      %1518 = vmatpush1.msra.mxu0 %v1417
      %1519 = vmatprep.subr.mxu0 0.0
      %1520 = vmatpush1.msra.mxu0 0.0
      %1521 = vmatprep.subr.mxu0 0.0
      %1522 = vmatpush1.msra.mxu0 0.0
      %1523 = vmatprep.subr.mxu0 0.0
      %1524 = vmatpush1.msra.mxu0 0.0
      %1525 = vmatprep.subr.mxu0 0.0
      %1526 = vmatpush1.msra.mxu0 0.0
      %1527 = vmatprep.subr.mxu0 0.0
      %1528 = vmatpush1.msra.mxu0 0.0
      %1529 = vmatprep.subr.mxu0 0.0
      %1530 = vmatpush1.msra.mxu0 0.0
      %1531 = vmatprep.subr.mxu0 0.0
      %1532 = vmatpush1.msra.mxu0 0.0
      %1533 = vmatprep.subr.mxu0 0.0
      %1534 = vmatpush1.msra.mxu0 0.0
      %1535 = vmatprep.subr.mxu0 0.0
      %1536 = vmatpush1.msra.mxu0 0.0
      %1537 = vmatprep.subr.mxu0 0.0
      %1538 = vmatpush1.msra.mxu0 0.0
      %1539 = vmatprep.subr.mxu0 0.0
      %1540 = vmatpush1.msra.mxu0 0.0
      %1541 = vmatprep.subr.mxu0 0.0
      %1542 = vmatpush1.msra.mxu0 0.0
      %1543 = vmatprep.subr.mxu0 0.0
      %1544 = vmatpush1.msra.mxu0 0.0
      %1545 = vmatprep.subr.mxu0 0.0
      %1546 = vmatpush1.msra.mxu0 0.0
      %1547 = vmatprep.subr.mxu0 0.0
      %1548 = vmatpush1.msra.mxu0 0.0
      %1549 = vmatprep.subr.mxu0 0.0
      %1550 = vmatpush1.msra.mxu0 0.0
      %1551 = vmatprep.subr.mxu0 0.0
      %1552 = vmatpush1.msra.mxu0 0.0
      %1553 = vmatprep.subr.mxu0 0.0
      %1554 = vmatpush1.msra.mxu0 0.0
      %1555 = vmatprep.subr.mxu0 0.0
      %1556 = vmatpush1.msra.mxu0 0.0
      %1557 = vmatprep.subr.mxu0 0.0
      %1558 = vmatpush1.msra.mxu0 0.0
      %1559 = vmatprep.subr.mxu0 0.0
      %1560 = vmatpush1.msra.mxu0 0.0
      %1561 = vmatprep.subr.mxu0 0.0
      %1562 = vmatpush1.msra.mxu0 0.0
      %1563 = vmatprep.subr.mxu0 0.0
      %1564 = vmatpush1.msra.mxu0 0.0
      %1565 = vmatprep.subr.mxu0 0.0
      %1566 = vmatpush1.msra.mxu0 0.0
      %1567 = vmatprep.subr.mxu0 0.0
      %1568 = vmatpush1.msra.mxu0 0.0
      %1569 = vmatprep.subr.mxu0 0.0
      %1570 = vmatpush1.msra.mxu0 0.0
      %1571 = vmatprep.subr.mxu0 0.0
      %1572 = vmatpush1.msra.mxu0 0.0
      %1573 = vmatprep.subr.mxu0 0.0
      %1574 = vmatpush1.msra.mxu0 0.0
      %1575 = vmatprep.mubr.f32.mxu0 0.0
      %1576 = vmatmul.mubr.f32.gmra.mrb[0].mxu0 %v1509
      %v1577 = vpop.f32.mrb[0].mxu0
      %v1578 = vadd.f32 %v1498, %v1577
      %v1579 = vpop.f32.mrb[0].mxu0
      %1580 = vdwg.mxu0
      %v1581 = vld [vmem:[%s10] sm:$0x1]
      %v1583 = vlaneseq
      %v1584 = vshrl.u32 %v1583, 7
      %v1585 = vsub.s32 0, %v1584
      %v1586 = vrot.slane %v1581, %v1585
      %v1588 = vadd.f32 %v1578, %v1586
      %v1589 = vmax.f32 %v1588, 0.0
      %v1590 = vld [vmem:[%s11] sm:$0xff]
      %v1591 = vld [vmem:[%s11 + $0x8] sm:$0xff]
      %v1592 = vld [vmem:[%s11 + $0x10] sm:$0xff]
      %v1593 = vld [vmem:[%s11 + $0x18] sm:$0xff]
      %v1594 = vld [vmem:[%s11 + $0x20] sm:$0xff]
      %v1595 = vld [vmem:[%s11 + $0x28] sm:$0xff]
      %v1596 = vld [vmem:[%s11 + $0x30] sm:$0xff]
      %v1597 = vld [vmem:[%s11 + $0x38] sm:$0xff]
      %v1598 = vld [vmem:[%s12] sm:$0x1]
      %v1600 = vlaneseq
      %v1601 = vshrl.u32 %v1600, 7
      %v1602 = vsub.s32 0, %v1601
      %v1603 = vrot.slane %v1598, %v1602
      %v1606 = vsel %vm1127, %v1589, 0
      %1608 = vmatprep.subr.mxu0 0.0
      %1609 = vmatpush1.msra.mxu0 %v1590
      %1610 = vmatprep.subr.mxu0 0.0
      %1611 = vmatpush1.msra.mxu0 %v1591
      %1612 = vmatprep.subr.mxu0 0.0
      %1613 = vmatpush1.msra.mxu0 %v1592
      %1614 = vmatprep.subr.mxu0 0.0
      %1615 = vmatpush1.msra.mxu0 %v1593
      %1616 = vmatprep.subr.mxu0 0.0
      %1617 = vmatpush1.msra.mxu0 %v1594
      %1618 = vmatprep.subr.mxu0 0.0
      %1619 = vmatpush1.msra.mxu0 %v1595
      %1620 = vmatprep.subr.mxu0 0.0
      %1621 = vmatpush1.msra.mxu0 %v1596
      %1622 = vmatprep.subr.mxu0 0.0
      %1623 = vmatpush1.msra.mxu0 %v1597
      %1624 = vmatprep.subr.mxu0 0.0
      %1625 = vmatpush1.msra.mxu0 0.0
      %1626 = vmatprep.subr.mxu0 0.0
      %1627 = vmatpush1.msra.mxu0 0.0
      %1628 = vmatprep.subr.mxu0 0.0
      %1629 = vmatpush1.msra.mxu0 0.0
      %1630 = vmatprep.subr.mxu0 0.0
      %1631 = vmatpush1.msra.mxu0 0.0
      %1632 = vmatprep.subr.mxu0 0.0
      %1633 = vmatpush1.msra.mxu0 0.0
      %1634 = vmatprep.subr.mxu0 0.0
      %1635 = vmatpush1.msra.mxu0 0.0
      %1636 = vmatprep.subr.mxu0 0.0
      %1637 = vmatpush1.msra.mxu0 0.0
      %1638 = vmatprep.subr.mxu0 0.0
      %1639 = vmatpush1.msra.mxu0 0.0
      %1640 = vmatprep.subr.mxu0 0.0
      %1641 = vmatpush1.msra.mxu0 0.0
      %1642 = vmatprep.subr.mxu0 0.0
      %1643 = vmatpush1.msra.mxu0 0.0
      %1644 = vmatprep.subr.mxu0 0.0
      %1645 = vmatpush1.msra.mxu0 0.0
      %1646 = vmatprep.subr.mxu0 0.0
      %1647 = vmatpush1.msra.mxu0 0.0
      %1648 = vmatprep.subr.mxu0 0.0
      %1649 = vmatpush1.msra.mxu0 0.0
      %1650 = vmatprep.subr.mxu0 0.0
      %1651 = vmatpush1.msra.mxu0 0.0
      %1652 = vmatprep.subr.mxu0 0.0
      %1653 = vmatpush1.msra.mxu0 0.0
      %1654 = vmatprep.subr.mxu0 0.0
      %1655 = vmatpush1.msra.mxu0 0.0
      %1656 = vmatprep.subr.mxu0 0.0
      %1657 = vmatpush1.msra.mxu0 0.0
      %1658 = vmatprep.subr.mxu0 0.0
      %1659 = vmatpush1.msra.mxu0 0.0
      %1660 = vmatprep.subr.mxu0 0.0
      %1661 = vmatpush1.msra.mxu0 0.0
      %1662 = vmatprep.subr.mxu0 0.0
      %1663 = vmatpush1.msra.mxu0 0.0
      %1664 = vmatprep.subr.mxu0 0.0
      %1665 = vmatpush1.msra.mxu0 0.0
      %1666 = vmatprep.subr.mxu0 0.0
      %1667 = vmatpush1.msra.mxu0 0.0
      %1668 = vmatprep.subr.mxu0 0.0
      %1669 = vmatpush1.msra.mxu0 0.0
      %1670 = vmatprep.subr.mxu0 0.0
      %1671 = vmatpush1.msra.mxu0 0.0
      %1672 = vmatprep.mubr.f32.mxu0 0.0
      %1673 = vmatmul.mubr.f32.gmra.mrb[0].mxu0 %v1606
      %v1674 = vpop.f32.mrb[0].mxu0
      %v1675 = vadd.f32 %v1603, %v1674
      %v1676 = vpop.f32.mrb[0].mxu0
      %1677 = vdwg.mxu0
      %v1678 = vmax.f32 %v1675, 0.0
      %v1679 = vld [vmem:[%s13] sm:$0xff]
      %v1680 = vld [vmem:[%s13 + $0x8] sm:$0xff]
      %v1681 = vld [vmem:[%s13 + $0x10] sm:$0xff]
      %v1682 = vld [vmem:[%s13 + $0x18] sm:$0xff]
      %v1683 = vld [vmem:[%s13 + $0x20] sm:$0xff]
      %v1684 = vld [vmem:[%s13 + $0x28] sm:$0xff]
      %v1685 = vld [vmem:[%s13 + $0x30] sm:$0xff]
      %v1686 = vld [vmem:[%s13 + $0x38] sm:$0xff]
      %v1687 = vld [vmem:[%s14] sm:$0x1]
      %v1689 = vlaneseq
      %v1690 = vshrl.u32 %v1689, 7
      %v1691 = vsub.s32 0, %v1690
      %v1692 = vrot.slane %v1687, %v1691
      %v1695 = vsel %vm1127, %v1678, 0
      %1697 = vmatprep.subr.mxu0 0.0
      %1698 = vmatpush1.msra.mxu0 %v1679
      %1699 = vmatprep.subr.mxu0 0.0
      %1700 = vmatpush1.msra.mxu0 %v1680
      %1701 = vmatprep.subr.mxu0 0.0
      %1702 = vmatpush1.msra.mxu0 %v1681
      %1703 = vmatprep.subr.mxu0 0.0
      %1704 = vmatpush1.msra.mxu0 %v1682
      %1705 = vmatprep.subr.mxu0 0.0
      %1706 = vmatpush1.msra.mxu0 %v1683
      %1707 = vmatprep.subr.mxu0 0.0
      %1708 = vmatpush1.msra.mxu0 %v1684
      %1709 = vmatprep.subr.mxu0 0.0
      %1710 = vmatpush1.msra.mxu0 %v1685
      %1711 = vmatprep.subr.mxu0 0.0
      %1712 = vmatpush1.msra.mxu0 %v1686
      %1713 = vmatprep.subr.mxu0 0.0
      %1714 = vmatpush1.msra.mxu0 0.0
      %1715 = vmatprep.subr.mxu0 0.0
      %1716 = vmatpush1.msra.mxu0 0.0
      %1717 = vmatprep.subr.mxu0 0.0
      %1718 = vmatpush1.msra.mxu0 0.0
      %1719 = vmatprep.subr.mxu0 0.0
      %1720 = vmatpush1.msra.mxu0 0.0
      %1721 = vmatprep.subr.mxu0 0.0
      %1722 = vmatpush1.msra.mxu0 0.0
      %1723 = vmatprep.subr.mxu0 0.0
      %1724 = vmatpush1.msra.mxu0 0.0
      %1725 = vmatprep.subr.mxu0 0.0
      %1726 = vmatpush1.msra.mxu0 0.0
      %1727 = vmatprep.subr.mxu0 0.0
      %1728 = vmatpush1.msra.mxu0 0.0
      %1729 = vmatprep.subr.mxu0 0.0
      %1730 = vmatpush1.msra.mxu0 0.0
      %1731 = vmatprep.subr.mxu0 0.0
      %1732 = vmatpush1.msra.mxu0 0.0
      %1733 = vmatprep.subr.mxu0 0.0
      %1734 = vmatpush1.msra.mxu0 0.0
      %1735 = vmatprep.subr.mxu0 0.0
      %1736 = vmatpush1.msra.mxu0 0.0
      %1737 = vmatprep.subr.mxu0 0.0
      %1738 = vmatpush1.msra.mxu0 0.0
      %1739 = vmatprep.subr.mxu0 0.0
      %1740 = vmatpush1.msra.mxu0 0.0
      %1741 = vmatprep.subr.mxu0 0.0
      %1742 = vmatpush1.msra.mxu0 0.0
      %1743 = vmatprep.subr.mxu0 0.0
      %1744 = vmatpush1.msra.mxu0 0.0
      %1745 = vmatprep.subr.mxu0 0.0
      %1746 = vmatpush1.msra.mxu0 0.0
      %1747 = vmatprep.subr.mxu0 0.0
      %1748 = vmatpush1.msra.mxu0 0.0
      %1749 = vmatprep.subr.mxu0 0.0
      %1750 = vmatpush1.msra.mxu0 0.0
      %1751 = vmatprep.subr.mxu0 0.0
      %1752 = vmatpush1.msra.mxu0 0.0
      %1753 = vmatprep.subr.mxu0 0.0
      %1754 = vmatpush1.msra.mxu0 0.0
      %1755 = vmatprep.subr.mxu0 0.0
      %1756 = vmatpush1.msra.mxu0 0.0
      %1757 = vmatprep.subr.mxu0 0.0
      %1758 = vmatpush1.msra.mxu0 0.0
      %1759 = vmatprep.subr.mxu0 0.0
      %1760 = vmatpush1.msra.mxu0 0.0
      %1761 = vmatprep.mubr.f32.mxu0 0.0
      %1762 = vmatmul.mubr.f32.gmra.mrb[0].mxu0 %v1695
      %v1763 = vpop.f32.mrb[0].mxu0
      %v1764 = vadd.f32 %v1692, %v1763
      %v1765 = vpop.f32.mrb[0].mxu0
      %1766 = vdwg.mxu0
      %v1767 = vmax.f32 %v1764, 0.0
      %v1768 = vld [vmem:[%s15] sm:$0xff]
      %v1769 = vld [vmem:[%s15 + $0x8] sm:$0xff]
      %v1770 = vld [vmem:[%s15 + $0x10] sm:$0xff]
      %v1771 = vld [vmem:[%s15 + $0x18] sm:$0xff]
      %v1772 = vld [vmem:[%s15 + $0x20] sm:$0xff]
      %v1773 = vld [vmem:[%s15 + $0x28] sm:$0xff]
      %v1774 = vld [vmem:[%s15 + $0x30] sm:$0xff]
      %v1775 = vld [vmem:[%s15 + $0x38] sm:$0xff]
      %v1776 = vld [vmem:[#allocation2] sm:$0x1]
      %v1778 = vlaneseq
      %v1779 = vshrl.u32 %v1778, 7
      %v1780 = vsub.s32 0, %v1779
      %v1781 = vrot.slane %v1776, %v1780
      %v1784 = vsel %vm1127, %v1767, 0
      %1786 = vmatprep.subr.mxu0 0.0
      %1787 = vmatpush1.msra.mxu0 %v1768
      %1788 = vmatprep.subr.mxu0 0.0
      %1789 = vmatpush1.msra.mxu0 %v1769
      %1790 = vmatprep.subr.mxu0 0.0
      %1791 = vmatpush1.msra.mxu0 %v1770
      %1792 = vmatprep.subr.mxu0 0.0
      %1793 = vmatpush1.msra.mxu0 %v1771
      %1794 = vmatprep.subr.mxu0 0.0
      %1795 = vmatpush1.msra.mxu0 %v1772
      %1796 = vmatprep.subr.mxu0 0.0
      %1797 = vmatpush1.msra.mxu0 %v1773
      %1798 = vmatprep.subr.mxu0 0.0
      %1799 = vmatpush1.msra.mxu0 %v1774
      %1800 = vmatprep.subr.mxu0 0.0
      %1801 = vmatpush1.msra.mxu0 %v1775
      %1802 = vmatprep.subr.mxu0 0.0
      %1803 = vmatpush1.msra.mxu0 0.0
      %1804 = vmatprep.subr.mxu0 0.0
      %1805 = vmatpush1.msra.mxu0 0.0
      %1806 = vmatprep.subr.mxu0 0.0
      %1807 = vmatpush1.msra.mxu0 0.0
      %1808 = vmatprep.subr.mxu0 0.0
      %1809 = vmatpush1.msra.mxu0 0.0
      %1810 = vmatprep.subr.mxu0 0.0
      %1811 = vmatpush1.msra.mxu0 0.0
      %1812 = vmatprep.subr.mxu0 0.0
      %1813 = vmatpush1.msra.mxu0 0.0
      %1814 = vmatprep.subr.mxu0 0.0
      %1815 = vmatpush1.msra.mxu0 0.0
      %1816 = vmatprep.subr.mxu0 0.0
      %1817 = vmatpush1.msra.mxu0 0.0
      %1818 = vmatprep.subr.mxu0 0.0
      %1819 = vmatpush1.msra.mxu0 0.0
      %1820 = vmatprep.subr.mxu0 0.0
      %1821 = vmatpush1.msra.mxu0 0.0
      %1822 = vmatprep.subr.mxu0 0.0
      %1823 = vmatpush1.msra.mxu0 0.0
      %1824 = vmatprep.subr.mxu0 0.0
      %1825 = vmatpush1.msra.mxu0 0.0
      %1826 = vmatprep.subr.mxu0 0.0
      %1827 = vmatpush1.msra.mxu0 0.0
      %1828 = vmatprep.subr.mxu0 0.0
      %1829 = vmatpush1.msra.mxu0 0.0
      %1830 = vmatprep.subr.mxu0 0.0
      %1831 = vmatpush1.msra.mxu0 0.0
      %1832 = vmatprep.subr.mxu0 0.0
      %1833 = vmatpush1.msra.mxu0 0.0
      %1834 = vmatprep.subr.mxu0 0.0
      %1835 = vmatpush1.msra.mxu0 0.0
      %1836 = vmatprep.subr.mxu0 0.0
      %1837 = vmatpush1.msra.mxu0 0.0
      %1838 = vmatprep.subr.mxu0 0.0
      %1839 = vmatpush1.msra.mxu0 0.0
      %1840 = vmatprep.subr.mxu0 0.0
      %1841 = vmatpush1.msra.mxu0 0.0
      %1842 = vmatprep.subr.mxu0 0.0
      %1843 = vmatpush1.msra.mxu0 0.0
      %1844 = vmatprep.subr.mxu0 0.0
      %1845 = vmatpush1.msra.mxu0 0.0
      %1846 = vmatprep.subr.mxu0 0.0
      %1847 = vmatpush1.msra.mxu0 0.0
      %1848 = vmatprep.subr.mxu0 0.0
      %1849 = vmatpush1.msra.mxu0 0.0
      %1850 = vmatprep.mubr.f32.mxu0 0.0
      %1851 = vmatmul.mubr.f32.gmra.mrb[0].mxu0 %v1784
      %v1852 = vpop.f32.mrb[0].mxu0
      %v1853 = vadd.f32 %v1781, %v1852
      %v1854 = vpop.f32.mrb[0].mxu0
      %1855 = vdwg.mxu0
      %vm1856 = vcmask 3072
      %1857 = vst.msk [vmem:[%s562] sm:$0xf] %vm1856, %v1853
      %p1858 = scmp.lt.s32.totalorder %s30, 1
      %s1859 = scalar_select %p1858, %s30, 1
      %s1860 = smul.addr %s1859, 4
      %s1861 = scalar_lea.vmem %s17, %s1860
      // Predicated region
      $region89: #{tpu_custom_call.1} parent=87 // pred_check
        %p1862 = pneg %p415
      $region90: #{tpu_custom_call.1} parent=87 // pred_check_branch
        %1864 = sbr.rel (%p1862) target = $region92
      $region91: #{tpu_custom_call.1} parent=87 // pred_region
        _
      $region92: #{tpu_custom_call.1} parent=87 // pred_fallthru
        _
    $region88: #{tpu_custom_call.1} parent=5 // pred_fallthru
      _
    %p1865 = scmp.le.s32.totalorder 2, %s25
    // Predicated region
    $region93: #{tpu_custom_call.1} parent=5 // pred_check
      %p1866 = pneg %p1865
    $region94: #{tpu_custom_call.1} parent=5 // pred_check_branch
      %1868 = sbr.rel (%p1866) target = $region96
    $region95: #{tpu_custom_call.1} parent=5 // pred_region
      %s1869 = ssub.s32 %s25, 2
      // Predicated region
      $region97: #{tpu_custom_call.1} parent=95 // pred_check
        %p1870 = pneg %p421
      $region98: #{tpu_custom_call.1} parent=95 // pred_check_branch
        %1872 = sbr.rel (%p1870) target = $region100
      $region99: #{tpu_custom_call.1} parent=95 // pred_region
        %p1873 = scmp.lt.s32.totalorder %s31, 1
        %s1874 = scalar_select %p1873, %s31, 1
        %s1875 = smul.addr %s1874, 4
        %s1876 = scalar_lea.vmem %s17, %s1875
      $region100: #{tpu_custom_call.1} parent=95 // pred_fallthru
        _
    $region96: #{tpu_custom_call.1} parent=5 // pred_fallthru
      _
  $region6: #{tpu_custom_call.1} parent=0 // loop_footer
    %s29 = sadd.s32 1, %s25
  $region7: #{tpu_custom_call.1} parent=0 // loop_footer_branch
    %24 = sbr.rel target = $region3
  $region8: #{tpu_custom_call.1} parent=0 // loop_exit
    _

</llo_original>
